<compile_context>
chip_gen: v5e
topology: v5e:2x2
jax: 0.10.0
libtpu: 0.0.40
codegen_flags: <defaults>
</compile_context>

<pallas_src>
import jax
import jax.numpy as jnp
from jax.experimental import pallas as pl
from jax.experimental.pallas import tpu as pltpu


def _triplet_kernel(a_ref, p_ref, n_ref, w_ref, b_ref, oa_ref, op_ref, on_ref):
    # One batch tile per grid step: three MXU matmuls against the resident bf16
    # weights, then bias + L2 normalization in f32, all in VMEM.
    w = w_ref[...]                       # [D_in, D_embed] bf16, VMEM-resident
    b = b_ref[...]                       # [1, D_embed]    f32

    def embed_and_normalize(x_ref, o_ref):
        x = x_ref[...]                   # [tm, D_in] bf16
        y = jnp.dot(x, w, preferred_element_type=jnp.float32) + b   # [tm, D_embed] f32
        # l2: y / sqrt(sum(y^2, axis=1)) — rsqrt runs on the otherwise-idle EUP.
        inv_norm = jax.lax.rsqrt(jnp.sum(y * y, axis=1, keepdims=True))
        o_ref[...] = (y * inv_norm).astype(o_ref.dtype)

    embed_and_normalize(a_ref, oa_ref)
    embed_and_normalize(p_ref, op_ref)
    embed_and_normalize(n_ref, on_ref)


def _pick_tm(batch, target):
    """Largest batch tile <= target that divides `batch` exactly (multiple of 8),
    preferring an even number of grid steps (balances v7x's two TensorCores).
    Falls back to the full batch as a single block (always a legal block shape)."""
    if batch <= target:
        return batch
    candidates = [t for t in range(8, target + 1, 8) if batch % t == 0]
    if not candidates:
        return batch
    even_grid = [t for t in candidates if (batch // t) % 2 == 0]
    return max(even_grid) if even_grid else max(candidates)


def _call(anchor, positive, negative, w, b2, tm, single_buffer_weights):
    B, D_in = anchor.shape
    D_embed = w.shape[1]
    grid = (B // tm,)

    def const_spec(shape):
        # W / b: constant index_map -> keep resident; single-buffer when supported.
        if single_buffer_weights:
            return pl.BlockSpec(shape, lambda i: (0, 0), pipeline_mode=pl.Buffered(1))
        return pl.BlockSpec(shape, lambda i: (0, 0))

    def x_spec():
        return pl.BlockSpec((tm, D_in), lambda i: (i, 0))

    def o_spec():
        return pl.BlockSpec((tm, D_embed), lambda i: (i, 0))

    o_shape = jax.ShapeDtypeStruct((B, D_embed), jnp.float32)

    # VMEM budget from the actual tile sizes (x / out tiles are double-buffered
    # by the Pallas pipeline).
    w_bufs = 1 if single_buffer_weights else 2
    vmem_bytes = (3 * 2 * tm * D_in * 2            # a/p/n tiles, bf16, double-buffered
                  + 3 * 2 * tm * D_embed * 4       # three f32 output tiles
                  + w_bufs * (D_in * D_embed * 2 + D_embed * 4))
    vmem_limit = int(min(64 * 1024 * 1024, max(16 * 1024 * 1024, 2 * vmem_bytes)))

    cost = pl.CostEstimate(
        flops=2 * 3 * B * D_in * D_embed,
        transcendentals=3 * B,                                    # one rsqrt per row
        bytes_accessed=(3 * B * D_in * 2 + D_in * D_embed * 2     # bf16 x, W
                        + D_embed * 4 + 3 * B * D_embed * 4),     # f32 b, outputs
    )

    return pl.pallas_call(
        _triplet_kernel,
        out_shape=(o_shape, o_shape, o_shape),
        grid_spec=pltpu.PrefetchScalarGridSpec(
            num_scalar_prefetch=0,
            grid=grid,
            in_specs=[
                x_spec(), x_spec(), x_spec(),        # anchor / positive / negative
                const_spec((D_in, D_embed)),         # W: VMEM-resident
                const_spec((1, D_embed)),            # b: VMEM-resident
            ],
            out_specs=[o_spec(), o_spec(), o_spec()],
        ),
        compiler_params=pltpu.CompilerParams(
            dimension_semantics=("parallel",),
            vmem_limit_bytes=vmem_limit,
        ),
        cost_estimate=cost,
    )(anchor, positive, negative, w, b2)


def triplet_network(anchor, positive, negative, w, b, *, tm=512):
    """Forward of TripletNetwork (Linear embedding model), fused in one pallas_call."""
    B, D_in = anchor.shape
    D_embed = w.shape[1]
    assert positive.shape == (B, D_in) and negative.shape == (B, D_in)

    # bf16 inputs/weights halve DMA bytes and feed the MXU at its native bf16
    # rate; accumulation + normalization stay f32 inside the kernel.
    def to_bf16(x):
        return x if x.dtype == jnp.bfloat16 else x.astype(jnp.bfloat16)

    anchor, positive, negative, w = map(to_bf16, (anchor, positive, negative, w))
    b2 = b.reshape(1, D_embed).astype(jnp.float32)

    tile_m = _pick_tm(B, tm)

    # TODO(synk): for very large D_in (W >~ 8-16 MiB) on v7x, add a K grid axis
    # marked "arbitrary" with an f32 accumulator scratch instead of a fully
    # resident W block.
    try:
        return _call(anchor, positive, negative, w, b2, tile_m,
                     single_buffer_weights=True)
    except Exception:
        # pl.Buffered(1) / pipeline_mode unsupported in this jax build — fall
        # back to the default double-buffered weight spec.
        return _call(anchor, positive, negative, w, b2, tile_m,
                     single_buffer_weights=False)


def _reference(x, w, b):
    # Module semantics applied to the bf16-quantized inputs/weights the kernel
    # actually consumes (f32 accumulation), so the tolerance stays tight.
    xq = x.astype(jnp.bfloat16).astype(jnp.float32)
    wq = w.astype(jnp.bfloat16).astype(jnp.float32)
    y = jnp.dot(xq, wq, precision=jax.lax.Precision.HIGHEST) + b
    return y / jnp.sqrt(jnp.sum(y * y, axis=1, keepdims=True))


if __name__ == "__main__":
    # Small but TPU-friendly shapes: lane-dense D_in/D_embed (multiples of 128)
    # and an even, multi-step grid (B=32, tm=8 -> grid=(4,)).
    B, D_in, D_embed = 32, 128, 128

    key = jax.random.PRNGKey(0)
    k_a, k_p, k_n, k_w, k_b = jax.random.split(key, 5)

    anchor = jax.random.normal(k_a, (B, D_in), dtype=jnp.float32)
    positive = jax.random.normal(k_p, (B, D_in), dtype=jnp.float32)
    negative = jax.random.normal(k_n, (B, D_in), dtype=jnp.float32)

    # Deterministic synthetic embedding-model parameters (Linear D_in -> D_embed).
    w = jax.random.normal(k_w, (D_in, D_embed), dtype=jnp.float32) * 0.1
    b = jax.random.normal(k_b, (D_embed,), dtype=jnp.float32) * 0.1

    # tm=8 at this toy size so the fused call exercises a multi-step, pipelined,
    # evenly-splittable grid; at real sizes leave the default tm=512.
    out_a, out_p, out_n = triplet_network(anchor, positive, negative, w, b, tm=8)
    jax.block_until_ready((out_a, out_p, out_n))

    # Correctness check against a pure-JAX reference of the same forward.
    for got, x in ((out_a, anchor), (out_p, positive), (out_n, negative)):
        ref = _reference(x, w, b)
        assert got.shape == (B, D_embed)
        assert got.dtype == jnp.float32
        assert jnp.allclose(got, ref, atol=1e-3, rtol=1e-3), "mismatch vs reference"

    print("KERNEL_OK")
</pallas_src>

<mosaic_0001>
module attributes {stable_mosaic.version = 11 : i64} {
  func.func @_triplet_kernel(%arg0: i32, %arg1: memref<8x128xbf16, #tpu.memory_space<vmem>>, %arg2: memref<8x128xbf16, #tpu.memory_space<vmem>>, %arg3: memref<8x128xbf16, #tpu.memory_space<vmem>>, %arg4: memref<128x128xbf16, #tpu.memory_space<vmem>>, %arg5: memref<1x128xf32, #tpu.memory_space<vmem>>, %arg6: memref<8x128xf32, #tpu.memory_space<vmem>>, %arg7: memref<8x128xf32, #tpu.memory_space<vmem>>, %arg8: memref<8x128xf32, #tpu.memory_space<vmem>>) attributes {dimension_semantics = [#tpu.dimension_semantics<parallel>], iteration_bounds = array<i64: 4>, scalar_prefetch = 0 : i64, scratch_operands = 0 : i64, tpu.core_type = #tpu.core_type<tc>, window_params = [{transform_indices = @transform_0, window_bounds = array<i64: 8, 128>}, {transform_indices = @transform_1, window_bounds = array<i64: 8, 128>}, {transform_indices = @transform_2, window_bounds = array<i64: 8, 128>}, {pipeline_mode = #tpu.pipeline_mode<synchronous>, transform_indices = @transform_3, window_bounds = array<i64: 128, 128>}, {pipeline_mode = #tpu.pipeline_mode<synchronous>, transform_indices = @transform_4, window_bounds = array<i64: 1, 128>}, {transform_indices = @transform_5, window_bounds = array<i64: 8, 128>}, {transform_indices = @transform_6, window_bounds = array<i64: 8, 128>}, {transform_indices = @transform_7, window_bounds = array<i64: 8, 128>}]} {
    %c0 = arith.constant 0 : index
    %c0_0 = arith.constant 0 : index
    %0 = vector.load %arg4[%c0, %c0_0] : memref<128x128xbf16, #tpu.memory_space<vmem>>, vector<128x128xbf16>
    %c0_1 = arith.constant 0 : index
    %c0_2 = arith.constant 0 : index
    %1 = vector.load %arg5[%c0_1, %c0_2] : memref<1x128xf32, #tpu.memory_space<vmem>>, vector<1x128xf32>
    %c0_3 = arith.constant 0 : index
    %c0_4 = arith.constant 0 : index
    %2 = vector.load %arg1[%c0_3, %c0_4] : memref<8x128xbf16, #tpu.memory_space<vmem>>, vector<8x128xbf16>
    %cst = arith.constant dense<0.000000e+00> : vector<8x128xf32>
    %3 = tpu.matmul %2, %0, %cst {dimension_numbers = #tpu.dot_dimension_numbers<[1], [0], [0], [1], [0, 0, 1, 1], [], []>} : vector<8x128xbf16>, vector<128x128xbf16>, vector<8x128xf32> -> vector<8x128xf32>
    %4 = vector.broadcast %1 : vector<1x128xf32> to vector<8x128xf32>
    %5 = arith.addf %3, %4 : vector<8x128xf32>
    %6 = arith.mulf %5, %5 : vector<8x128xf32>
    %cst_5 = arith.constant dense<0.000000e+00> : vector<8xf32>
    %7 = vector.multi_reduction <add>, %6, %cst_5 [1] : vector<8x128xf32> to vector<8xf32>
    %8 = vector.shape_cast %7 : vector<8xf32> to vector<8x1xf32>
    %9 = math.rsqrt %8 : vector<8x1xf32>
    %10 = vector.broadcast %9 : vector<8x1xf32> to vector<8x128xf32>
    %11 = arith.mulf %5, %10 : vector<8x128xf32>
    %c0_6 = arith.constant 0 : index
    %c0_7 = arith.constant 0 : index
    %12 = vector.load %arg6[%c0_6, %c0_7] : memref<8x128xf32, #tpu.memory_space<vmem>>, vector<8x128xf32>
    tpu.vector_store %arg6[%c0_6, %c0_7], %11 {strides = array<i32>} : memref<8x128xf32, #tpu.memory_space<vmem>>, vector<8x128xf32>,
    %c0_8 = arith.constant 0 : index
    %c0_9 = arith.constant 0 : index
    %13 = vector.load %arg2[%c0_8, %c0_9] : memref<8x128xbf16, #tpu.memory_space<vmem>>, vector<8x128xbf16>
    %cst_10 = arith.constant dense<0.000000e+00> : vector<8x128xf32>
    %14 = tpu.matmul %13, %0, %cst_10 {dimension_numbers = #tpu.dot_dimension_numbers<[1], [0], [0], [1], [0, 0, 1, 1], [], []>} : vector<8x128xbf16>, vector<128x128xbf16>, vector<8x128xf32> -> vector<8x128xf32>
    %15 = vector.broadcast %1 : vector<1x128xf32> to vector<8x128xf32>
    %16 = arith.addf %14, %15 : vector<8x128xf32>
    %17 = arith.mulf %16, %16 : vector<8x128xf32>
    %cst_11 = arith.constant dense<0.000000e+00> : vector<8xf32>
    %18 = vector.multi_reduction <add>, %17, %cst_11 [1] : vector<8x128xf32> to vector<8xf32>
    %19 = vector.shape_cast %18 : vector<8xf32> to vector<8x1xf32>
    %20 = math.rsqrt %19 : vector<8x1xf32>
    %21 = vector.broadcast %20 : vector<8x1xf32> to vector<8x128xf32>
    %22 = arith.mulf %16, %21 : vector<8x128xf32>
    %c0_12 = arith.constant 0 : index
    %c0_13 = arith.constant 0 : index
    %23 = vector.load %arg7[%c0_12, %c0_13] : memref<8x128xf32, #tpu.memory_space<vmem>>, vector<8x128xf32>
    tpu.vector_store %arg7[%c0_12, %c0_13], %22 {strides = array<i32>} : memref<8x128xf32, #tpu.memory_space<vmem>>, vector<8x128xf32>,
    %c0_14 = arith.constant 0 : index
    %c0_15 = arith.constant 0 : index
    %24 = vector.load %arg3[%c0_14, %c0_15] : memref<8x128xbf16, #tpu.memory_space<vmem>>, vector<8x128xbf16>
    %cst_16 = arith.constant dense<0.000000e+00> : vector<8x128xf32>
    %25 = tpu.matmul %24, %0, %cst_16 {dimension_numbers = #tpu.dot_dimension_numbers<[1], [0], [0], [1], [0, 0, 1, 1], [], []>} : vector<8x128xbf16>, vector<128x128xbf16>, vector<8x128xf32> -> vector<8x128xf32>
    %26 = vector.broadcast %1 : vector<1x128xf32> to vector<8x128xf32>
    %27 = arith.addf %25, %26 : vector<8x128xf32>
    %28 = arith.mulf %27, %27 : vector<8x128xf32>
    %cst_17 = arith.constant dense<0.000000e+00> : vector<8xf32>
    %29 = vector.multi_reduction <add>, %28, %cst_17 [1] : vector<8x128xf32> to vector<8xf32>
    %30 = vector.shape_cast %29 : vector<8xf32> to vector<8x1xf32>
    %31 = math.rsqrt %30 : vector<8x1xf32>
    %32 = vector.broadcast %31 : vector<8x1xf32> to vector<8x128xf32>
    %33 = arith.mulf %27, %32 : vector<8x128xf32>
    %c0_18 = arith.constant 0 : index
    %c0_19 = arith.constant 0 : index
    %34 = vector.load %arg8[%c0_18, %c0_19] : memref<8x128xf32, #tpu.memory_space<vmem>>, vector<8x128xf32>
    tpu.vector_store %arg8[%c0_18, %c0_19], %33 {strides = array<i32>} : memref<8x128xf32, #tpu.memory_space<vmem>>, vector<8x128xf32>,
    return
  }
  func.func @transform_0(%arg0: i32) -> (i32, i32) {
    %c0_i32 = arith.constant 0 : i32
    %c0_i32_0 = arith.constant 0 : i32
    return %arg0, %c0_i32 : i32, i32
  }
  func.func @transform_1(%arg0: i32) -> (i32, i32) {
    %c0_i32 = arith.constant 0 : i32
    %c0_i32_0 = arith.constant 0 : i32
    return %arg0, %c0_i32 : i32, i32
  }
  func.func @transform_2(%arg0: i32) -> (i32, i32) {
    %c0_i32 = arith.constant 0 : i32
    %c0_i32_0 = arith.constant 0 : i32
    return %arg0, %c0_i32 : i32, i32
  }
  func.func @transform_3(%arg0: i32) -> (i32, i32) {
    %c0_i32 = arith.constant 0 : i32
    %c0_i32_0 = arith.constant 0 : i32
    %c0_i32_1 = arith.constant 0 : i32
    return %c0_i32, %c0_i32_0 : i32, i32
  }
  func.func @transform_4(%arg0: i32) -> (i32, i32) {
    %c0_i32 = arith.constant 0 : i32
    %c0_i32_0 = arith.constant 0 : i32
    %c0_i32_1 = arith.constant 0 : i32
    return %c0_i32, %c0_i32_0 : i32, i32
  }
  func.func @transform_5(%arg0: i32) -> (i32, i32) {
    %c0_i32 = arith.constant 0 : i32
    %c0_i32_0 = arith.constant 0 : i32
    return %arg0, %c0_i32 : i32, i32
  }
  func.func @transform_6(%arg0: i32) -> (i32, i32) {
    %c0_i32 = arith.constant 0 : i32
    %c0_i32_0 = arith.constant 0 : i32
    return %arg0, %c0_i32 : i32, i32
  }
  func.func @transform_7(%arg0: i32) -> (i32, i32) {
    %c0_i32 = arith.constant 0 : i32
    %c0_i32_0 = arith.constant 0 : i32
    return %arg0, %c0_i32 : i32, i32
  }
}

module attributes {stable_mosaic.version = 11 : i64} {
  func.func @_triplet_kernel(%arg0: i32, %arg1: memref<8x128xbf16, #tpu.memory_space<vmem>>, %arg2: memref<8x128xbf16, #tpu.memory_space<vmem>>, %arg3: memref<8x128xbf16, #tpu.memory_space<vmem>>, %arg4: memref<128x128xbf16, #tpu.memory_space<vmem>>, %arg5: memref<1x128xf32, #tpu.memory_space<vmem>>, %arg6: memref<8x128xf32, #tpu.memory_space<vmem>>, %arg7: memref<8x128xf32, #tpu.memory_space<vmem>>, %arg8: memref<8x128xf32, #tpu.memory_space<vmem>>) attributes {dimension_semantics = [#tpu.dimension_semantics<parallel>], iteration_bounds = array<i64: 4>, scalar_prefetch = 0 : i64, scratch_operands = 0 : i64, tpu.core_type = #tpu.core_type<tc>, window_params = [{transform_indices = @transform_0, window_bounds = array<i64: 8, 128>}, {transform_indices = @transform_1, window_bounds = array<i64: 8, 128>}, {transform_indices = @transform_2, window_bounds = array<i64: 8, 128>}, {pipeline_mode = #tpu.pipeline_mode<synchronous>, transform_indices = @transform_3, window_bounds = array<i64: 128, 128>}, {pipeline_mode = #tpu.pipeline_mode<synchronous>, transform_indices = @transform_4, window_bounds = array<i64: 1, 128>}, {transform_indices = @transform_5, window_bounds = array<i64: 8, 128>}, {transform_indices = @transform_6, window_bounds = array<i64: 8, 128>}, {transform_indices = @transform_7, window_bounds = array<i64: 8, 128>}]} {
    %c0 = arith.constant 0 : index
    %c0_0 = arith.constant 0 : index
    %0 = vector.load %arg4[%c0, %c0_0] : memref<128x128xbf16, #tpu.memory_space<vmem>>, vector<128x128xbf16>
    %c0_1 = arith.constant 0 : index
    %c0_2 = arith.constant 0 : index
    %1 = vector.load %arg5[%c0_1, %c0_2] : memref<1x128xf32, #tpu.memory_space<vmem>>, vector<1x128xf32>
    %c0_3 = arith.constant 0 : index
    %c0_4 = arith.constant 0 : index
    %2 = vector.load %arg1[%c0_3, %c0_4] : memref<8x128xbf16, #tpu.memory_space<vmem>>, vector<8x128xbf16>
    %cst = arith.constant dense<0.000000e+00> : vector<8x128xf32>
    %3 = tpu.matmul %2, %0, %cst {dimension_numbers = #tpu.dot_dimension_numbers<[1], [0], [0], [1], [0, 0, 1, 1], [], []>} : vector<8x128xbf16>, vector<128x128xbf16>, vector<8x128xf32> -> vector<8x128xf32>
    %4 = vector.broadcast %1 : vector<1x128xf32> to vector<8x128xf32>
    %5 = arith.addf %3, %4 : vector<8x128xf32>
    %6 = arith.mulf %5, %5 : vector<8x128xf32>
    %cst_5 = arith.constant dense<0.000000e+00> : vector<8xf32>
    %7 = vector.multi_reduction <add>, %6, %cst_5 [1] : vector<8x128xf32> to vector<8xf32>
    %8 = vector.shape_cast %7 : vector<8xf32> to vector<8x1xf32>
    %9 = math.rsqrt %8 : vector<8x1xf32>
    %10 = vector.broadcast %9 : vector<8x1xf32> to vector<8x128xf32>
    %11 = arith.mulf %5, %10 : vector<8x128xf32>
    %c0_6 = arith.constant 0 : index
    %c0_7 = arith.constant 0 : index
    %12 = vector.load %arg6[%c0_6, %c0_7] : memref<8x128xf32, #tpu.memory_space<vmem>>, vector<8x128xf32>
    tpu.vector_store %arg6[%c0_6, %c0_7], %11 {strides = array<i32>} : memref<8x128xf32, #tpu.memory_space<vmem>>, vector<8x128xf32>,
    %c0_8 = arith.constant 0 : index
    %c0_9 = arith.constant 0 : index
    %13 = vector.load %arg2[%c0_8, %c0_9] : memref<8x128xbf16, #tpu.memory_space<vmem>>, vector<8x128xbf16>
    %cst_10 = arith.constant dense<0.000000e+00> : vector<8x128xf32>
    %14 = tpu.matmul %13, %0, %cst_10 {dimension_numbers = #tpu.dot_dimension_numbers<[1], [0], [0], [1], [0, 0, 1, 1], [], []>} : vector<8x128xbf16>, vector<128x128xbf16>, vector<8x128xf32> -> vector<8x128xf32>
    %15 = vector.broadcast %1 : vector<1x128xf32> to vector<8x128xf32>
    %16 = arith.addf %14, %15 : vector<8x128xf32>
    %17 = arith.mulf %16, %16 : vector<8x128xf32>
    %cst_11 = arith.constant dense<0.000000e+00> : vector<8xf32>
    %18 = vector.multi_reduction <add>, %17, %cst_11 [1] : vector<8x128xf32> to vector<8xf32>
    %19 = vector.shape_cast %18 : vector<8xf32> to vector<8x1xf32>
    %20 = math.rsqrt %19 : vector<8x1xf32>
    %21 = vector.broadcast %20 : vector<8x1xf32> to vector<8x128xf32>
    %22 = arith.mulf %16, %21 : vector<8x128xf32>
    %c0_12 = arith.constant 0 : index
    %c0_13 = arith.constant 0 : index
    %23 = vector.load %arg7[%c0_12, %c0_13] : memref<8x128xf32, #tpu.memory_space<vmem>>, vector<8x128xf32>
    tpu.vector_store %arg7[%c0_12, %c0_13], %22 {strides = array<i32>} : memref<8x128xf32, #tpu.memory_space<vmem>>, vector<8x128xf32>,
    %c0_14 = arith.constant 0 : index
    %c0_15 = arith.constant 0 : index
    %24 = vector.load %arg3[%c0_14, %c0_15] : memref<8x128xbf16, #tpu.memory_space<vmem>>, vector<8x128xbf16>
    %cst_16 = arith.constant dense<0.000000e+00> : vector<8x128xf32>
    %25 = tpu.matmul %24, %0, %cst_16 {dimension_numbers = #tpu.dot_dimension_numbers<[1], [0], [0], [1], [0, 0, 1, 1], [], []>} : vector<8x128xbf16>, vector<128x128xbf16>, vector<8x128xf32> -> vector<8x128xf32>
    %26 = vector.broadcast %1 : vector<1x128xf32> to vector<8x128xf32>
    %27 = arith.addf %25, %26 : vector<8x128xf32>
    %28 = arith.mulf %27, %27 : vector<8x128xf32>
    %cst_17 = arith.constant dense<0.000000e+00> : vector<8xf32>
    %29 = vector.multi_reduction <add>, %28, %cst_17 [1] : vector<8x128xf32> to vector<8xf32>
    %30 = vector.shape_cast %29 : vector<8xf32> to vector<8x1xf32>
    %31 = math.rsqrt %30 : vector<8x1xf32>
    %32 = vector.broadcast %31 : vector<8x1xf32> to vector<8x128xf32>
    %33 = arith.mulf %27, %32 : vector<8x128xf32>
    %c0_18 = arith.constant 0 : index
    %c0_19 = arith.constant 0 : index
    %34 = vector.load %arg8[%c0_18, %c0_19] : memref<8x128xf32, #tpu.memory_space<vmem>>, vector<8x128xf32>
    tpu.vector_store %arg8[%c0_18, %c0_19], %33 {strides = array<i32>} : memref<8x128xf32, #tpu.memory_space<vmem>>, vector<8x128xf32>,
    return
  }
  func.func @transform_0(%arg0: i32) -> (i32, i32) {
    %c0_i32 = arith.constant 0 : i32
    %c0_i32_0 = arith.constant 0 : i32
    return %arg0, %c0_i32 : i32, i32
  }
  func.func @transform_1(%arg0: i32) -> (i32, i32) {
    %c0_i32 = arith.constant 0 : i32
    %c0_i32_0 = arith.constant 0 : i32
    return %arg0, %c0_i32 : i32, i32
  }
  func.func @transform_2(%arg0: i32) -> (i32, i32) {
    %c0_i32 = arith.constant 0 : i32
    %c0_i32_0 = arith.constant 0 : i32
    return %arg0, %c0_i32 : i32, i32
  }
  func.func @transform_3(%arg0: i32) -> (i32, i32) {
    %c0_i32 = arith.constant 0 : i32
    %c0_i32_0 = arith.constant 0 : i32
    %c0_i32_1 = arith.constant 0 : i32
    return %c0_i32, %c0_i32_0 : i32, i32
  }
  func.func @transform_4(%arg0: i32) -> (i32, i32) {
    %c0_i32 = arith.constant 0 : i32
    %c0_i32_0 = arith.constant 0 : i32
    %c0_i32_1 = arith.constant 0 : i32
    return %c0_i32, %c0_i32_0 : i32, i32
  }
  func.func @transform_5(%arg0: i32) -> (i32, i32) {
    %c0_i32 = arith.constant 0 : i32
    %c0_i32_0 = arith.constant 0 : i32
    return %arg0, %c0_i32 : i32, i32
  }
  func.func @transform_6(%arg0: i32) -> (i32, i32) {
    %c0_i32 = arith.constant 0 : i32
    %c0_i32_0 = arith.constant 0 : i32
    return %arg0, %c0_i32 : i32, i32
  }
  func.func @transform_7(%arg0: i32) -> (i32, i32) {
    %c0_i32 = arith.constant 0 : i32
    %c0_i32_0 = arith.constant 0 : i32
    return %arg0, %c0_i32 : i32, i32
  }
}

</mosaic_0001>

<llo_original>
// kernel: tpu_custom_call.1
$region0: #{tpu_custom_call.1}
  #allocation0 [shape = 'u32[]', space=smem, size = 0x4, offset = 0x4, fixed_abs, tag = 'smem constant byte address 0x4 - core index']
  #allocation1 [shape = 'u32[72,128]{1,0:T(1,128)}', space=vmem, size = 0x9000, scoped, tag = 'internal scratch']
  %s0 = inlined_call_operand.hbm [shape: bf16[32,128], index: 0, kind: input, shape index: {}]
  %s1 = inlined_call_operand.hbm [shape: bf16[32,128], index: 1, kind: input, shape index: {}]
  %s2 = inlined_call_operand.hbm [shape: bf16[32,128], index: 2, kind: input, shape index: {}]
  %s3 = inlined_call_operand.hbm [shape: bf16[128,128], index: 3, kind: input, shape index: {}]
  %s4 = inlined_call_operand.vmem [shape: f32[1,128], index: 4, kind: input, shape index: {}]
  %s5 = inlined_call_operand.hbm [shape: f32[32,128], index: 5, kind: output, shape index: {0}]
  %s6 = inlined_call_operand.hbm [shape: f32[32,128], index: 6, kind: output, shape index: {1}]
  %s7 = inlined_call_operand.hbm [shape: f32[32,128], index: 7, kind: output, shape index: {2}]
  %8 = xla_tuple %s5, %s6, %s7
  %s9 = sld [smem:[#allocation0]]
  $region85: #{tpu_custom_call.1} parent=0
    _
  %s11 = ssub.s32 1, %s9
  %s12 = scalar_select 0, %s11, %s9
  $region1: #{tpu_custom_call.1} parent=0
    #allocation2 [shape = 'u8[4096]{0}', space=vmem, size = 0x1000, scoped, tag = 'input window, operand 0']
    #allocation3 [shape = 's32[2]{0}', space=sflag, size = 0x8, scoped, tag = 'scoped memory for tpu_custom_call.1']
    #allocation4 [shape = 's32[2]{0}', space=sflag, size = 0x8, scoped, tag = 'scoped memory for tpu_custom_call.1']
    #allocation5 [shape = 'u8[4096]{0}', space=vmem, size = 0x1000, scoped, tag = 'input window, operand 1']
    #allocation6 [shape = 's32[2]{0}', space=sflag, size = 0x8, scoped, tag = 'scoped memory for tpu_custom_call.1']
    #allocation7 [shape = 'u8[4096]{0}', space=vmem, size = 0x1000, scoped, tag = 'input window, operand 2']
    #allocation8 [shape = 'u8[32768]{0}', space=vmem, size = 0x8000, scoped, tag = 'input window, operand 3, single buffered']
    #allocation9 [shape = 's32[1]{0}', space=sflag, size = 0x4, scoped, tag = 'scoped memory for tpu_custom_call.1']
    #allocation10 [shape = 'u8[8192]{0}', space=vmem, size = 0x2000, scoped, tag = 'output window, operand 0']
    #allocation11 [shape = 'u8[8192]{0}', space=vmem, size = 0x2000, scoped, tag = 'output window, operand 1']
    #allocation12 [shape = 's32[2]{0}', space=sflag, size = 0x8, scoped, tag = 'scoped memory for tpu_custom_call.1']
    #allocation13 [shape = 'u8[8192]{0}', space=vmem, size = 0x2000, scoped, tag = 'output window, operand 2']
    %13 = vsyncpa [#allocation3], 0
    %s14 = scalar_lea.sflag [#allocation3], 1
    %15 = vsyncpa %s14, 0
    %16 = vsyncpa [#allocation6], 0
    %s17 = scalar_lea.sflag [#allocation6], 1
    %18 = vsyncpa %s17, 0
    %19 = vsyncpa [#allocation9], 0
    %20 = vsyncpa [#allocation4], 0
    %s21 = scalar_lea.sflag [#allocation4], 1
    %22 = vsyncpa %s21, 0
    %23 = vsyncpa [#allocation12], 0
    %s24 = scalar_lea.sflag [#allocation12], 1
    %25 = vsyncpa %s24, 0
    loop: start=0, step=1, limit=6
    $region2: #{tpu_custom_call.1} parent=1 // loop_pre_header
      _
    $region3: #{tpu_custom_call.1} parent=1 // loop_header
      %s27 = sphi 0, %s31
      %p28 = scmp.ge.s32.totalorder %s27, 6
      %s37 = sphi 0, %s39
      %s40 = sphi 0, %s37
      %s41 = sphi 0, %s40
      %s57 = sphi 0, %s41
      %s63 = sphi 0, %s65
      %s66 = sphi 0, %s63
      %s67 = sphi 0, %s66
      %s83 = sphi 0, %s67
      %s89 = sphi 0, %s91
      %s92 = sphi 0, %s89
      %s93 = sphi 0, %s92
      %s109 = sphi 0, %s93
      %s113 = sphi 0, %s113
      %s115 = sphi 0, %s113
      %s116 = sphi 0, %s115
      %s130 = sphi 0, %s116
      %s134 = sphi 0, %s134
      %s136 = sphi 0, %s134
      %s137 = sphi 0, %s136
      %s151 = sphi 0, %s137
      %s157 = sphi 0, %s159
      %s160 = sphi 0, %s157
      %s161 = sphi 0, %s160
      %s177 = sphi 0, %s161
      %s183 = sphi 0, %s185
      %s186 = sphi 0, %s183
      %s187 = sphi 0, %s186
      %s203 = sphi 0, %s187
      %s209 = sphi 0, %s211
      %s212 = sphi 0, %s209
      %s213 = sphi 0, %s212
      %s229 = sphi 0, %s213
    $region4: #{tpu_custom_call.1} parent=1 // loop_header_branch
      %30 = sbr.rel (%p28) target = $region8
    $region5: #{tpu_custom_call.1} parent=1 // loop_body
      %s32 = ssub.s32 %s27, 1
      %s33 = ssub.s32 %s27, 2
      %s34 = sadd.s32 %s27, 1
      %s35 = ssub.s32 %s27, %s34
      %p36 = scmp.eq.s32.totalorder %s35, 0
      %s38 = sadd.s32 %s37, 1
      %s39 = scalar_select %p36, %s37, %s38
      %p42 = pneg %p36
      %p43 = scmp.eq.s32.totalorder %s27, 3
      %p44 = por %p42, %p43
      %p45 = scmp.ne.s32.totalorder %s37, %s40
      %p46 = scmp.eq.s32.totalorder %s27, 0
      %p47 = por %p45, %p46
      %p48 = scmp.ne.s32.totalorder %s37, %s40
      %p49 = scmp.eq.s32.totalorder %s32, 3
      %p50 = por %p48, %p49
      %p51 = scmp.ne.s32.totalorder %s40, %s41
      %p52 = scmp.eq.s32.totalorder %s32, 0
      %p53 = por %p51, %p52
      %p54 = scmp.ne.s32.totalorder %s40, %s41
      %p55 = scmp.eq.s32.totalorder %s33, 3
      %p56 = por %p54, %p55
      %p58 = scmp.ne.s32.totalorder %s41, %s57
      %p59 = scmp.eq.s32.totalorder %s33, 0
      %p60 = por %p58, %p59
      %s61 = ssub.s32 %s27, %s34
      %p62 = scmp.eq.s32.totalorder %s61, 0
      %s64 = sadd.s32 %s63, 1
      %s65 = scalar_select %p62, %s63, %s64
      %p68 = pneg %p62
      %p69 = scmp.eq.s32.totalorder %s27, 3
      %p70 = por %p68, %p69
      %p71 = scmp.ne.s32.totalorder %s63, %s66
      %p72 = scmp.eq.s32.totalorder %s27, 0
      %p73 = por %p71, %p72
      %p74 = scmp.ne.s32.totalorder %s63, %s66
      %p75 = scmp.eq.s32.totalorder %s32, 3
      %p76 = por %p74, %p75
      %p77 = scmp.ne.s32.totalorder %s66, %s67
      %p78 = scmp.eq.s32.totalorder %s32, 0
      %p79 = por %p77, %p78
      %p80 = scmp.ne.s32.totalorder %s66, %s67
      %p81 = scmp.eq.s32.totalorder %s33, 3
      %p82 = por %p80, %p81
      %p84 = scmp.ne.s32.totalorder %s67, %s83
      %p85 = scmp.eq.s32.totalorder %s33, 0
      %p86 = por %p84, %p85
      %s87 = ssub.s32 %s27, %s34
      %p88 = scmp.eq.s32.totalorder %s87, 0
      %s90 = sadd.s32 %s89, 1
      %s91 = scalar_select %p88, %s89, %s90
      %p94 = pneg %p88
      %p95 = scmp.eq.s32.totalorder %s27, 3
      %p96 = por %p94, %p95
      %p97 = scmp.ne.s32.totalorder %s89, %s92
      %p98 = scmp.eq.s32.totalorder %s27, 0
      %p99 = por %p97, %p98
      %p100 = scmp.ne.s32.totalorder %s89, %s92
      %p101 = scmp.eq.s32.totalorder %s32, 3
      %p102 = por %p100, %p101
      %p103 = scmp.ne.s32.totalorder %s92, %s93
      %p104 = scmp.eq.s32.totalorder %s32, 0
      %p105 = por %p103, %p104
      %p106 = scmp.ne.s32.totalorder %s92, %s93
      %p107 = scmp.eq.s32.totalorder %s33, 3
      %p108 = por %p106, %p107
      %p110 = scmp.ne.s32.totalorder %s93, %s109
      %p111 = scmp.eq.s32.totalorder %s33, 0
      %p112 = por %p110, %p111
      %s114 = sadd.s32 %s113, 1
      %p117 = scmp.eq.s32.totalorder %s27, 3
      %p118 = scmp.ne.s32.totalorder %s113, %s115
      %p119 = scmp.eq.s32.totalorder %s27, 0
      %p120 = por %p118, %p119
      %p121 = scmp.ne.s32.totalorder %s113, %s115
      %p122 = scmp.eq.s32.totalorder %s32, 3
      %p123 = por %p121, %p122
      %p124 = scmp.ne.s32.totalorder %s115, %s116
      %p125 = scmp.eq.s32.totalorder %s32, 0
      %p126 = por %p124, %p125
      %p127 = scmp.ne.s32.totalorder %s115, %s116
      %p128 = scmp.eq.s32.totalorder %s33, 3
      %p129 = por %p127, %p128
      %p131 = scmp.ne.s32.totalorder %s116, %s130
      %p132 = scmp.eq.s32.totalorder %s33, 0
      %p133 = por %p131, %p132
      %s135 = sadd.s32 %s134, 1
      %p138 = scmp.eq.s32.totalorder %s27, 3
      %p139 = scmp.ne.s32.totalorder %s134, %s136
      %p140 = scmp.eq.s32.totalorder %s27, 0
      %p141 = por %p139, %p140
      %p142 = scmp.ne.s32.totalorder %s134, %s136
      %p143 = scmp.eq.s32.totalorder %s32, 3
      %p144 = por %p142, %p143
      %p145 = scmp.ne.s32.totalorder %s136, %s137
      %p146 = scmp.eq.s32.totalorder %s32, 0
      %p147 = por %p145, %p146
      %p148 = scmp.ne.s32.totalorder %s136, %s137
      %p149 = scmp.eq.s32.totalorder %s33, 3
      %p150 = por %p148, %p149
      %p152 = scmp.ne.s32.totalorder %s137, %s151
      %p153 = scmp.eq.s32.totalorder %s33, 0
      %p154 = por %p152, %p153
      %s155 = ssub.s32 %s27, %s34
      %p156 = scmp.eq.s32.totalorder %s155, 0
      %s158 = sadd.s32 %s157, 1
      %s159 = scalar_select %p156, %s157, %s158
      %p162 = pneg %p156
      %p163 = scmp.eq.s32.totalorder %s27, 3
      %p164 = por %p162, %p163
      %p165 = scmp.ne.s32.totalorder %s157, %s160
      %p166 = scmp.eq.s32.totalorder %s27, 0
      %p167 = por %p165, %p166
      %p168 = scmp.ne.s32.totalorder %s157, %s160
      %p169 = scmp.eq.s32.totalorder %s32, 3
      %p170 = por %p168, %p169
      %p171 = scmp.ne.s32.totalorder %s160, %s161
      %p172 = scmp.eq.s32.totalorder %s32, 0
      %p173 = por %p171, %p172
      %p174 = scmp.ne.s32.totalorder %s160, %s161
      %p175 = scmp.eq.s32.totalorder %s33, 3
      %p176 = por %p174, %p175
      %p178 = scmp.ne.s32.totalorder %s161, %s177
      %p179 = scmp.eq.s32.totalorder %s33, 0
      %p180 = por %p178, %p179
      %s181 = ssub.s32 %s27, %s34
      %p182 = scmp.eq.s32.totalorder %s181, 0
      %s184 = sadd.s32 %s183, 1
      %s185 = scalar_select %p182, %s183, %s184
      %p188 = pneg %p182
      %p189 = scmp.eq.s32.totalorder %s27, 3
      %p190 = por %p188, %p189
      %p191 = scmp.ne.s32.totalorder %s183, %s186
      %p192 = scmp.eq.s32.totalorder %s27, 0
      %p193 = por %p191, %p192
      %p194 = scmp.ne.s32.totalorder %s183, %s186
      %p195 = scmp.eq.s32.totalorder %s32, 3
      %p196 = por %p194, %p195
      %p197 = scmp.ne.s32.totalorder %s186, %s187
      %p198 = scmp.eq.s32.totalorder %s32, 0
      %p199 = por %p197, %p198
      %p200 = scmp.ne.s32.totalorder %s186, %s187
      %p201 = scmp.eq.s32.totalorder %s33, 3
      %p202 = por %p200, %p201
      %p204 = scmp.ne.s32.totalorder %s187, %s203
      %p205 = scmp.eq.s32.totalorder %s33, 0
      %p206 = por %p204, %p205
      %s207 = ssub.s32 %s27, %s34
      %p208 = scmp.eq.s32.totalorder %s207, 0
      %s210 = sadd.s32 %s209, 1
      %s211 = scalar_select %p208, %s209, %s210
      %p214 = pneg %p208
      %p215 = scmp.eq.s32.totalorder %s27, 3
      %p216 = por %p214, %p215
      %p217 = scmp.ne.s32.totalorder %s209, %s212
      %p218 = scmp.eq.s32.totalorder %s27, 0
      %p219 = por %p217, %p218
      %p220 = scmp.ne.s32.totalorder %s209, %s212
      %p221 = scmp.eq.s32.totalorder %s32, 3
      %p222 = por %p220, %p221
      %p223 = scmp.ne.s32.totalorder %s212, %s213
      %p224 = scmp.eq.s32.totalorder %s32, 0
      %p225 = por %p223, %p224
      %p226 = scmp.ne.s32.totalorder %s212, %s213
      %p227 = scmp.eq.s32.totalorder %s33, 3
      %p228 = por %p226, %p227
      %p230 = scmp.ne.s32.totalorder %s213, %s229
      %p231 = scmp.eq.s32.totalorder %s33, 0
      %p232 = por %p230, %p231
      %p233 = scmp.le.s32.totalorder 1, %s27
      %p234 = scmp.lt.s32.totalorder %s27, 5
      %p235 = pnand %p233, %p234
      %p236 = pneg %p235
      // Predicated region
      $region9: #{tpu_custom_call.1} parent=5 // pred_check
        _
      $region10: #{tpu_custom_call.1} parent=5 // pred_check_branch
        %238 = sbr.rel (%p235) target = $region12
      $region11: #{tpu_custom_call.1} parent=5 // pred_region
        %s239 = ssub.s32 %s27, 1
        // Predicated region
        $region13: #{tpu_custom_call.1} parent=11 // pred_check
          %p240 = pneg %p126
        $region14: #{tpu_custom_call.1} parent=11 // pred_check_branch
          %242 = sbr.rel (%p240) target = $region16
        $region15: #{tpu_custom_call.1} parent=11 // pred_region
          %244 = vsyncadd [#allocation9], 0
          %s245 = sshll.u32 %s3, 4
          %s246 = int_to_ptr.hbm [resolvable:$true] %s245
          %s247 = sshll.u32 [#allocation8], 4
          %s248 = int_to_ptr.vmem [resolvable:$true] %s247
          %253 = dma.hbm_to_vmem [thread:$0]  %s246, 1024, %s248, [#allocation9], 64, 64, 4
        $region16: #{tpu_custom_call.1} parent=11 // pred_fallthru
          _
        // Predicated region
        $region17: #{tpu_custom_call.1} parent=11 // pred_check
          %p254 = pneg %p147
        $region18: #{tpu_custom_call.1} parent=11 // pred_check_branch
          %256 = sbr.rel (%p254) target = $region20
        $region19: #{tpu_custom_call.1} parent=11 // pred_region
          _
        $region20: #{tpu_custom_call.1} parent=11 // pred_fallthru
          _
      $region12: #{tpu_custom_call.1} parent=5 // pred_fallthru
        _
      %p257 = scmp.lt.s32.totalorder %s27, 4
      // Predicated region
      $region21: #{tpu_custom_call.1} parent=5 // pred_check
        %p258 = pneg %p257
      $region22: #{tpu_custom_call.1} parent=5 // pred_check_branch
        %260 = sbr.rel (%p258) target = $region24
      $region23: #{tpu_custom_call.1} parent=5 // pred_region
        // Predicated region
        $region25: #{tpu_custom_call.1} parent=23 // pred_check
          %p261 = pneg %p47
        $region26: #{tpu_custom_call.1} parent=23 // pred_check_branch
          %263 = sbr.rel (%p261) target = $region28
        $region27: #{tpu_custom_call.1} parent=23 // pred_region
          %s264 = sand.u32 %s37, 1
          %s265 = scalar_lea.sflag [#allocation3], %s264
          %s266 = sand.u32 %s37, 1
          %s267 = smul.addr %s266, 4
          %s268 = scalar_lea.vmem [#allocation2], %s267
          %270 = vsyncadd %s265, 0
          %s271 = smul.addr %s27, 4
          %s272 = scalar_lea.hbm %s0, %s271
          %s274 = sshll.u32 %s272, 4
          %s275 = int_to_ptr.hbm [resolvable:$true] %s274
          %s276 = sshll.u32 %s268, 4
          %s277 = int_to_ptr.vmem [resolvable:$true] %s276
          %279 = dma.hbm_to_vmem [thread:$0]  %s275, 64, %s277, %s265
        $region28: #{tpu_custom_call.1} parent=23 // pred_fallthru
          _
        // Predicated region
        $region29: #{tpu_custom_call.1} parent=23 // pred_check
          %p280 = pneg %p73
        $region30: #{tpu_custom_call.1} parent=23 // pred_check_branch
          %282 = sbr.rel (%p280) target = $region32
        $region31: #{tpu_custom_call.1} parent=23 // pred_region
          %s283 = sand.u32 %s27, 1
          %s284 = scalar_lea.sflag [#allocation6], %s283
          %s285 = sand.u32 %s63, 1
          %s286 = smul.addr %s285, 4
          %s287 = scalar_lea.vmem [#allocation5], %s286
          %289 = vsyncadd %s284, 0
          %s290 = smul.addr %s27, 4
          %s291 = scalar_lea.hbm %s1, %s290
          %s293 = sshll.u32 %s291, 4
          %s294 = int_to_ptr.hbm [resolvable:$true] %s293
          %s295 = sshll.u32 %s287, 4
          %s296 = int_to_ptr.vmem [resolvable:$true] %s295
          %298 = dma.hbm_to_vmem [thread:$0]  %s294, 64, %s296, %s284
        $region32: #{tpu_custom_call.1} parent=23 // pred_fallthru
          _
        // Predicated region
        $region33: #{tpu_custom_call.1} parent=23 // pred_check
          %p299 = pneg %p99
        $region34: #{tpu_custom_call.1} parent=23 // pred_check_branch
          %301 = sbr.rel (%p299) target = $region36
        $region35: #{tpu_custom_call.1} parent=23 // pred_region
          %s302 = sand.u32 %s27, 1
          %s303 = scalar_lea.sflag [#allocation6], %s302
          %s304 = sand.u32 %s89, 1
          %s305 = smul.addr %s304, 4
          %s306 = scalar_lea.vmem [#allocation7], %s305
          %308 = vsyncadd %s303, 0
          %s309 = smul.addr %s27, 4
          %s310 = scalar_lea.hbm %s2, %s309
          %s312 = sshll.u32 %s310, 4
          %s313 = int_to_ptr.hbm [resolvable:$true] %s312
          %s314 = sshll.u32 %s306, 4
          %s315 = int_to_ptr.vmem [resolvable:$true] %s314
          %317 = dma.hbm_to_vmem [thread:$0]  %s313, 64, %s315, %s303
        $region36: #{tpu_custom_call.1} parent=23 // pred_fallthru
          _
      $region24: #{tpu_custom_call.1} parent=5 // pred_fallthru
        _
      %p318 = scmp.le.s32.totalorder 1, %s27
      %p319 = scmp.lt.s32.totalorder %s27, 5
      %p320 = pnand %p318, %p319
      %p321 = pneg %p320
      // Predicated region
      $region37: #{tpu_custom_call.1} parent=5 // pred_check
        _
      $region38: #{tpu_custom_call.1} parent=5 // pred_check_branch
        %323 = sbr.rel (%p320) target = $region40
      $region39: #{tpu_custom_call.1} parent=5 // pred_region
        %s324 = ssub.s32 %s27, 1
        %s325 = sand.u32 %s40, 1
        %s326 = scalar_lea.sflag [#allocation3], %s325
        %s327 = sand.u32 %s40, 1
        %s328 = smul.addr %s327, 4
        %s329 = scalar_lea.vmem [#allocation2], %s328
        // Predicated region
        $region41: #{tpu_custom_call.1} parent=39 // pred_check
          %p330 = pneg %p53
        $region42: #{tpu_custom_call.1} parent=39 // pred_check_branch
          %332 = sbr.rel (%p330) target = $region44
        $region43: #{tpu_custom_call.1} parent=39 // pred_region
          %334 = dma.done %s326, 64
        $region44: #{tpu_custom_call.1} parent=39 // pred_fallthru
          _
        %s335 = sand.u32 %s32, 1
        %s336 = scalar_lea.sflag [#allocation6], %s335
        %s337 = sand.u32 %s66, 1
        %s338 = smul.addr %s337, 4
        %s339 = scalar_lea.vmem [#allocation5], %s338
        // Predicated region
        $region45: #{tpu_custom_call.1} parent=39 // pred_check
          %p340 = pneg %p79
        $region46: #{tpu_custom_call.1} parent=39 // pred_check_branch
          %342 = sbr.rel (%p340) target = $region48
        $region47: #{tpu_custom_call.1} parent=39 // pred_region
          %344 = dma.done %s336, 64
        $region48: #{tpu_custom_call.1} parent=39 // pred_fallthru
          _
        %s345 = sand.u32 %s32, 1
        %s346 = scalar_lea.sflag [#allocation6], %s345
        %s347 = sand.u32 %s92, 1
        %s348 = smul.addr %s347, 4
        %s349 = scalar_lea.vmem [#allocation7], %s348
        // Predicated region
        $region49: #{tpu_custom_call.1} parent=39 // pred_check
          %p350 = pneg %p105
        $region50: #{tpu_custom_call.1} parent=39 // pred_check_branch
          %352 = sbr.rel (%p350) target = $region52
        $region51: #{tpu_custom_call.1} parent=39 // pred_region
          %354 = dma.done %s346, 64
        $region52: #{tpu_custom_call.1} parent=39 // pred_fallthru
          _
        // Predicated region
        $region53: #{tpu_custom_call.1} parent=39 // pred_check
          %p355 = pneg %p126
        $region54: #{tpu_custom_call.1} parent=39 // pred_check_branch
          %357 = sbr.rel (%p355) target = $region56
        $region55: #{tpu_custom_call.1} parent=39 // pred_region
          %359 = dma.done [#allocation9], 1024
        $region56: #{tpu_custom_call.1} parent=39 // pred_fallthru
          _
        %s360 = sand.u32 %s40, 1
        %s361 = scalar_lea.sflag [#allocation3], %s360
        %s362 = sand.u32 %s40, 1
        %s363 = smul.addr %s362, 4
        %s364 = scalar_lea.vmem [#allocation2], %s363
        %p365 = pneg %p53
        %p366 = pneg %p50
        %s367 = sand.u32 %s32, 1
        %s368 = scalar_lea.sflag [#allocation6], %s367
        %s369 = sand.u32 %s66, 1
        %s370 = smul.addr %s369, 4
        %s371 = scalar_lea.vmem [#allocation5], %s370
        %p372 = pneg %p79
        %p373 = pneg %p76
        %s374 = sand.u32 %s32, 1
        %s375 = scalar_lea.sflag [#allocation6], %s374
        %s376 = sand.u32 %s92, 1
        %s377 = smul.addr %s376, 4
        %s378 = scalar_lea.vmem [#allocation7], %s377
        %p379 = pneg %p105
        %p380 = pneg %p102
        %p381 = pneg %p126
        %p382 = pneg %p123
        %p383 = pneg %p147
        %p384 = pneg %p144
        %p385 = pneg %p173
        %p386 = pneg %p170
        %s387 = sand.u32 %s160, 1
        %s388 = scalar_lea.sflag [#allocation4], %s387
        %s389 = sand.u32 %s160, 1
        %s390 = smul.addr %s389, 8
        %s391 = scalar_lea.vmem [#allocation10], %s390
        %p392 = pneg %p199
        %p393 = pneg %p196
        %s394 = sand.u32 %s32, 1
        %s395 = scalar_lea.sflag [#allocation12], %s394
        %s396 = sand.u32 %s186, 1
        %s397 = smul.addr %s396, 8
        %s398 = scalar_lea.vmem [#allocation11], %s397
        %p399 = pneg %p225
        %p400 = pneg %p222
        %s401 = sand.u32 %s32, 1
        %s402 = scalar_lea.sflag [#allocation12], %s401
        %s403 = sand.u32 %s212, 1
        %s404 = smul.addr %s403, 8
        %s405 = scalar_lea.vmem [#allocation13], %s404
        %v406 = vld [vmem:[#allocation8] sm:$0xf]
        %v407 = vld [vmem:[#allocation8 + $0x4] sm:$0xf]
        %v408 = vld [vmem:[#allocation8 + $0x8] sm:$0xf]
        %v409 = vld [vmem:[#allocation8 + $0xc] sm:$0xf]
        %v410 = vld [vmem:[#allocation8 + $0x10] sm:$0xf]
        %v411 = vld [vmem:[#allocation8 + $0x14] sm:$0xf]
        %v412 = vld [vmem:[#allocation8 + $0x18] sm:$0xf]
        %v413 = vld [vmem:[#allocation8 + $0x1c] sm:$0xf]
        %v414 = vld [vmem:[#allocation8 + $0x20] sm:$0xf]
        %v415 = vld [vmem:[#allocation8 + $0x24] sm:$0xf]
        %v416 = vld [vmem:[#allocation8 + $0x28] sm:$0xf]
        %v417 = vld [vmem:[#allocation8 + $0x2c] sm:$0xf]
        %v418 = vld [vmem:[#allocation8 + $0x30] sm:$0xf]
        %v419 = vld [vmem:[#allocation8 + $0x34] sm:$0xf]
        %v420 = vld [vmem:[#allocation8 + $0x38] sm:$0xf]
        %v421 = vld [vmem:[#allocation8 + $0x3c] sm:$0xf]
        %v422 = vld [vmem:[%s4] sm:$0x1]
        %v423 = vld [vmem:[%s329] sm:$0xf]
        %v425 = vperm.slane %v422, 0
        %v443 = vunpack.c.l.b16 %v406
        %v444 = vunpack.c.l.b16 %v407
        %v445 = vunpack.c.l.b16 %v408
        %v446 = vunpack.c.l.b16 %v409
        %v447 = vunpack.c.l.b16 %v410
        %v448 = vunpack.c.l.b16 %v411
        %v449 = vunpack.c.l.b16 %v412
        %v450 = vunpack.c.l.b16 %v413
        %v451 = vunpack.c.l.b16 %v414
        %v452 = vunpack.c.l.b16 %v415
        %v453 = vunpack.c.l.b16 %v416
        %v454 = vunpack.c.l.b16 %v417
        %v455 = vunpack.c.l.b16 %v418
        %v456 = vunpack.c.l.b16 %v419
        %v457 = vunpack.c.l.b16 %v420
        %v458 = vunpack.c.l.b16 %v421
        %v459 = vpack.c.b16 %v444, %v443
        %v460 = vpack.c.b16 %v446, %v445
        %v461 = vpack.c.b16 %v448, %v447
        %v462 = vpack.c.b16 %v450, %v449
        %v463 = vpack.c.b16 %v452, %v451
        %v464 = vpack.c.b16 %v454, %v453
        %v465 = vpack.c.b16 %v456, %v455
        %v466 = vpack.c.b16 %v458, %v457
        %475 = vmatpush.bf16.msra.mxu0 %v466
        %476 = vmatpush.bf16.msra.mxu0 %v465
        %477 = vmatpush.bf16.msra.mxu0 %v464
        %478 = vmatpush.bf16.msra.mxu0 %v463
        %479 = vmatpush.bf16.msra.mxu0 %v462
        %480 = vmatpush.bf16.msra.mxu0 %v461
        %481 = vmatpush.bf16.msra.mxu0 %v460
        %482 = vmatpush.bf16.msra.mxu0 %v459
        %483 = vmatmul.bf16.gmra.mxu0 %v423
        %v484 = vpop.f32.mrf.mxu0
        %v485 = vadd.f32 %v425, %v484
        %v486 = vpop.f32.mrf.mxu0
        %487 = vdwg.mxu0
        %v488 = vmul.f32 %v485, %v485
        %489 = vadd.xlane.f32.xlu0 %v488
        %v490 = vpop.xlane.xlu0 %489
        %v491 = vrsqrt.pop %v490
        %v492 = vmul.f32 %v491, %v490
        %v493 = vmul.f32 %v492, %v491
        %v494 = vmul.f32 0.5, %v493
        %v495 = vsub.f32 1.5, %v494
        %v496 = vmul.f32 %v491, %v495
        %vm497 = vweird.f32 %v490
        %vm498 = vweird.f32 %v491
        %vm499 = vmor %vm497, %vm498
        %v500 = vsel %vm499, %v491, %v496
        %v501 = vmul.f32 %v485, %v500
        %502 = vst [vmem:[%s391] sm:$0xff] %v501
        %v503 = vld [vmem:[%s339] sm:$0xf]
        %504 = vmatpush.bf16.msra.mxu0 %v466
        %505 = vmatpush.bf16.msra.mxu0 %v465
        %506 = vmatpush.bf16.msra.mxu0 %v464
        %507 = vmatpush.bf16.msra.mxu0 %v463
        %508 = vmatpush.bf16.msra.mxu0 %v462
        %509 = vmatpush.bf16.msra.mxu0 %v461
        %510 = vmatpush.bf16.msra.mxu0 %v460
        %511 = vmatpush.bf16.msra.mxu0 %v459
        %512 = vmatmul.bf16.gmra.mxu0 %v503
        %v513 = vpop.f32.mrf.mxu0
        %v514 = vadd.f32 %v425, %v513
        %v515 = vpop.f32.mrf.mxu0
        %516 = vdwg.mxu0
        %v517 = vmul.f32 %v514, %v514
        %518 = vadd.xlane.f32.xlu0 %v517
        %v519 = vpop.xlane.xlu0 %518
        %v520 = vrsqrt.pop %v519
        %v521 = vmul.f32 %v520, %v519
        %v522 = vmul.f32 %v521, %v520
        %v523 = vmul.f32 0.5, %v522
        %v524 = vsub.f32 1.5, %v523
        %v525 = vmul.f32 %v520, %v524
        %vm526 = vweird.f32 %v519
        %vm527 = vweird.f32 %v520
        %vm528 = vmor %vm526, %vm527
        %v529 = vsel %vm528, %v520, %v525
        %v530 = vmul.f32 %v514, %v529
        %531 = vst [vmem:[%s398] sm:$0xff] %v530
        %v532 = vld [vmem:[%s349] sm:$0xf]
        %533 = vmatpush.bf16.msra.mxu0 %v466
        %534 = vmatpush.bf16.msra.mxu0 %v465
        %535 = vmatpush.bf16.msra.mxu0 %v464
        %536 = vmatpush.bf16.msra.mxu0 %v463
        %537 = vmatpush.bf16.msra.mxu0 %v462
        %538 = vmatpush.bf16.msra.mxu0 %v461
        %539 = vmatpush.bf16.msra.mxu0 %v460
        %540 = vmatpush.bf16.msra.mxu0 %v459
        %541 = vmatmul.bf16.gmra.mxu0 %v532
        %v542 = vpop.f32.mrf.mxu0
        %v543 = vadd.f32 %v425, %v542
        %v544 = vpop.f32.mrf.mxu0
        %545 = vdwg.mxu0
        %v546 = vmul.f32 %v543, %v543
        %547 = vadd.xlane.f32.xlu0 %v546
        %v548 = vpop.xlane.xlu0 %547
        %v549 = vrsqrt.pop %v548
        %v550 = vmul.f32 %v549, %v548
        %v551 = vmul.f32 %v550, %v549
        %v552 = vmul.f32 0.5, %v551
        %v553 = vsub.f32 1.5, %v552
        %v554 = vmul.f32 %v549, %v553
        %vm555 = vweird.f32 %v548
        %vm556 = vweird.f32 %v549
        %vm557 = vmor %vm555, %vm556
        %v558 = vsel %vm557, %v549, %v554
        %v559 = vmul.f32 %v543, %v558
        %560 = vst [vmem:[%s405] sm:$0xff] %v559
        %s561 = sand.u32 %s160, 1
        %s562 = scalar_lea.sflag [#allocation4], %s561
        %s563 = sand.u32 %s160, 1
        %s564 = smul.addr %s563, 8
        %s565 = scalar_lea.vmem [#allocation10], %s564
        %s566 = sand.u32 %s32, 1
        %s567 = scalar_lea.sflag [#allocation12], %s566
        %s568 = sand.u32 %s186, 1
        %s569 = smul.addr %s568, 8
        %s570 = scalar_lea.vmem [#allocation11], %s569
        %s571 = sand.u32 %s32, 1
        %s572 = scalar_lea.sflag [#allocation12], %s571
        %s573 = sand.u32 %s212, 1
        %s574 = smul.addr %s573, 8
        %s575 = scalar_lea.vmem [#allocation13], %s574
        // Predicated region
        $region57: #{tpu_custom_call.1} parent=39 // pred_check
          %p576 = pneg %p170
        $region58: #{tpu_custom_call.1} parent=39 // pred_check_branch
          %578 = sbr.rel (%p576) target = $region60
        $region59: #{tpu_custom_call.1} parent=39 // pred_region
          %580 = vsyncadd %s562, 0
          %s581 = smul.addr %s32, 8
          %s582 = scalar_lea.hbm %s5, %s581
          %s584 = sshll.u32 %s565, 4
          %s585 = int_to_ptr.vmem [resolvable:$true] %s584
          %s586 = sshll.u32 %s582, 4
          %s587 = int_to_ptr.hbm [resolvable:$true] %s586
          %589 = dma.vmem_to_hbm [thread:$0]  %s585, 128, %s587, %s562
        $region60: #{tpu_custom_call.1} parent=39 // pred_fallthru
          _
        // Predicated region
        $region61: #{tpu_custom_call.1} parent=39 // pred_check
          %p590 = pneg %p196
        $region62: #{tpu_custom_call.1} parent=39 // pred_check_branch
          %592 = sbr.rel (%p590) target = $region64
        $region63: #{tpu_custom_call.1} parent=39 // pred_region
          %594 = vsyncadd %s567, 0
          %s595 = smul.addr %s32, 8
          %s596 = scalar_lea.hbm %s6, %s595
          %s598 = sshll.u32 %s570, 4
          %s599 = int_to_ptr.vmem [resolvable:$true] %s598
          %s600 = sshll.u32 %s596, 4
          %s601 = int_to_ptr.hbm [resolvable:$true] %s600
          %603 = dma.vmem_to_hbm [thread:$0]  %s599, 128, %s601, %s567
        $region64: #{tpu_custom_call.1} parent=39 // pred_fallthru
          _
        // Predicated region
        $region65: #{tpu_custom_call.1} parent=39 // pred_check
          %p604 = pneg %p222
        $region66: #{tpu_custom_call.1} parent=39 // pred_check_branch
          %606 = sbr.rel (%p604) target = $region68
        $region67: #{tpu_custom_call.1} parent=39 // pred_region
          %608 = vsyncadd %s572, 0
          %s609 = smul.addr %s32, 8
          %s610 = scalar_lea.hbm %s7, %s609
          %s612 = sshll.u32 %s575, 4
          %s613 = int_to_ptr.vmem [resolvable:$true] %s612
          %s614 = sshll.u32 %s610, 4
          %s615 = int_to_ptr.hbm [resolvable:$true] %s614
          %617 = dma.vmem_to_hbm [thread:$0]  %s613, 128, %s615, %s572
        $region68: #{tpu_custom_call.1} parent=39 // pred_fallthru
          _
      $region40: #{tpu_custom_call.1} parent=5 // pred_fallthru
        _
      %p618 = scmp.le.s32.totalorder 2, %s27
      // Predicated region
      $region69: #{tpu_custom_call.1} parent=5 // pred_check
        %p619 = pneg %p618
      $region70: #{tpu_custom_call.1} parent=5 // pred_check_branch
        %621 = sbr.rel (%p619) target = $region72
      $region71: #{tpu_custom_call.1} parent=5 // pred_region
        %s622 = ssub.s32 %s27, 2
        // Predicated region
        $region73: #{tpu_custom_call.1} parent=71 // pred_check
          %p623 = pneg %p176
        $region74: #{tpu_custom_call.1} parent=71 // pred_check_branch
          %625 = sbr.rel (%p623) target = $region76
        $region75: #{tpu_custom_call.1} parent=71 // pred_region
          %s626 = sand.u32 %s161, 1
          %s627 = scalar_lea.sflag [#allocation4], %s626
          %s628 = sand.u32 %s161, 1
          %s629 = smul.addr %s628, 8
          %s630 = scalar_lea.vmem [#allocation10], %s629
          %632 = dma.done %s627, 128
        $region76: #{tpu_custom_call.1} parent=71 // pred_fallthru
          _
        // Predicated region
        $region77: #{tpu_custom_call.1} parent=71 // pred_check
          %p633 = pneg %p202
        $region78: #{tpu_custom_call.1} parent=71 // pred_check_branch
          %635 = sbr.rel (%p633) target = $region80
        $region79: #{tpu_custom_call.1} parent=71 // pred_region
          %s636 = sand.u32 %s33, 1
          %s637 = scalar_lea.sflag [#allocation12], %s636
          %s638 = sand.u32 %s187, 1
          %s639 = smul.addr %s638, 8
          %s640 = scalar_lea.vmem [#allocation11], %s639
          %642 = dma.done %s637, 128
        $region80: #{tpu_custom_call.1} parent=71 // pred_fallthru
          _
        // Predicated region
        $region81: #{tpu_custom_call.1} parent=71 // pred_check
          %p643 = pneg %p228
        $region82: #{tpu_custom_call.1} parent=71 // pred_check_branch
          %645 = sbr.rel (%p643) target = $region84
        $region83: #{tpu_custom_call.1} parent=71 // pred_region
          %s646 = sand.u32 %s33, 1
          %s647 = scalar_lea.sflag [#allocation12], %s646
          %s648 = sand.u32 %s213, 1
          %s649 = smul.addr %s648, 8
          %s650 = scalar_lea.vmem [#allocation13], %s649
          %652 = dma.done %s647, 128
        $region84: #{tpu_custom_call.1} parent=71 // pred_fallthru
          _
      $region72: #{tpu_custom_call.1} parent=5 // pred_fallthru
        _
    $region6: #{tpu_custom_call.1} parent=1 // loop_footer
      %s31 = sadd.s32 1, %s27
    $region7: #{tpu_custom_call.1} parent=1 // loop_footer_branch
      %26 = sbr.rel target = $region3
    $region8: #{tpu_custom_call.1} parent=1 // loop_exit
      _
    %653 = vsyncpa [#allocation3], 1
    %s654 = scalar_lea.sflag [#allocation3], 1
    %655 = vsyncpa %s654, 1
    %656 = vsyncpa [#allocation6], 1
    %s657 = scalar_lea.sflag [#allocation6], 1
    %658 = vsyncpa %s657, 1
    %659 = vsyncpa [#allocation9], 1
    %660 = vsyncpa [#allocation4], 1
    %s661 = scalar_lea.sflag [#allocation4], 1
    %662 = vsyncpa %s661, 1
    %663 = vsyncpa [#allocation12], 1
    %s664 = scalar_lea.sflag [#allocation12], 1
    %665 = vsyncpa %s664, 1

// kernel: tpu_custom_call.1
$region0: #{tpu_custom_call.1}
  #allocation0 [shape = 'u32[]', space=smem, size = 0x4, offset = 0x4, fixed_abs, tag = 'smem constant byte address 0x4 - core index']
  #allocation1 [shape = 'u32[72,128]{1,0:T(1,128)}', space=vmem, size = 0x9000, scoped, tag = 'internal scratch']
  %s0 = inlined_call_operand.hbm [shape: bf16[32,128], index: 0, kind: input, shape index: {}]
  %s1 = inlined_call_operand.hbm [shape: bf16[32,128], index: 1, kind: input, shape index: {}]
  %s2 = inlined_call_operand.hbm [shape: bf16[32,128], index: 2, kind: input, shape index: {}]
  %s3 = inlined_call_operand.hbm [shape: bf16[128,128], index: 3, kind: input, shape index: {}]
  %s4 = inlined_call_operand.vmem [shape: f32[1,128], index: 4, kind: input, shape index: {}]
  %s5 = inlined_call_operand.hbm [shape: f32[32,128], index: 5, kind: output, shape index: {0}]
  %s6 = inlined_call_operand.hbm [shape: f32[32,128], index: 6, kind: output, shape index: {1}]
  %s7 = inlined_call_operand.hbm [shape: f32[32,128], index: 7, kind: output, shape index: {2}]
  %8 = xla_tuple %s5, %s6, %s7
  %s9 = sld [smem:[#allocation0]]
  $region85: #{tpu_custom_call.1} parent=0
    _
  %s11 = ssub.s32 1, %s9
  %s12 = scalar_select 0, %s11, %s9
  $region1: #{tpu_custom_call.1} parent=0
    #allocation2 [shape = 'u8[4096]{0}', space=vmem, size = 0x1000, scoped, tag = 'input window, operand 0']
    #allocation3 [shape = 's32[2]{0}', space=sflag, size = 0x8, scoped, tag = 'scoped memory for tpu_custom_call.1']
    #allocation4 [shape = 's32[2]{0}', space=sflag, size = 0x8, scoped, tag = 'scoped memory for tpu_custom_call.1']
    #allocation5 [shape = 'u8[4096]{0}', space=vmem, size = 0x1000, scoped, tag = 'input window, operand 1']
    #allocation6 [shape = 's32[2]{0}', space=sflag, size = 0x8, scoped, tag = 'scoped memory for tpu_custom_call.1']
    #allocation7 [shape = 'u8[4096]{0}', space=vmem, size = 0x1000, scoped, tag = 'input window, operand 2']
    #allocation8 [shape = 'u8[32768]{0}', space=vmem, size = 0x8000, scoped, tag = 'input window, operand 3, single buffered']
    #allocation9 [shape = 's32[1]{0}', space=sflag, size = 0x4, scoped, tag = 'scoped memory for tpu_custom_call.1']
    #allocation10 [shape = 'u8[8192]{0}', space=vmem, size = 0x2000, scoped, tag = 'output window, operand 0']
    #allocation11 [shape = 'u8[8192]{0}', space=vmem, size = 0x2000, scoped, tag = 'output window, operand 1']
    #allocation12 [shape = 's32[2]{0}', space=sflag, size = 0x8, scoped, tag = 'scoped memory for tpu_custom_call.1']
    #allocation13 [shape = 'u8[8192]{0}', space=vmem, size = 0x2000, scoped, tag = 'output window, operand 2']
    %13 = vsyncpa [#allocation3], 0
    %s14 = scalar_lea.sflag [#allocation3], 1
    %15 = vsyncpa %s14, 0
    %16 = vsyncpa [#allocation6], 0
    %s17 = scalar_lea.sflag [#allocation6], 1
    %18 = vsyncpa %s17, 0
    %19 = vsyncpa [#allocation9], 0
    %20 = vsyncpa [#allocation4], 0
    %s21 = scalar_lea.sflag [#allocation4], 1
    %22 = vsyncpa %s21, 0
    %23 = vsyncpa [#allocation12], 0
    %s24 = scalar_lea.sflag [#allocation12], 1
    %25 = vsyncpa %s24, 0
    loop: start=0, step=1, limit=6
    $region2: #{tpu_custom_call.1} parent=1 // loop_pre_header
      _
    $region3: #{tpu_custom_call.1} parent=1 // loop_header
      %s27 = sphi 0, %s31
      %p28 = scmp.ge.s32.totalorder %s27, 6
      %s37 = sphi 0, %s39
      %s40 = sphi 0, %s37
      %s41 = sphi 0, %s40
      %s57 = sphi 0, %s41
      %s63 = sphi 0, %s65
      %s66 = sphi 0, %s63
      %s67 = sphi 0, %s66
      %s83 = sphi 0, %s67
      %s89 = sphi 0, %s91
      %s92 = sphi 0, %s89
      %s93 = sphi 0, %s92
      %s109 = sphi 0, %s93
      %s113 = sphi 0, %s113
      %s115 = sphi 0, %s113
      %s116 = sphi 0, %s115
      %s130 = sphi 0, %s116
      %s134 = sphi 0, %s134
      %s136 = sphi 0, %s134
      %s137 = sphi 0, %s136
      %s151 = sphi 0, %s137
      %s157 = sphi 0, %s159
      %s160 = sphi 0, %s157
      %s161 = sphi 0, %s160
      %s177 = sphi 0, %s161
      %s183 = sphi 0, %s185
      %s186 = sphi 0, %s183
      %s187 = sphi 0, %s186
      %s203 = sphi 0, %s187
      %s209 = sphi 0, %s211
      %s212 = sphi 0, %s209
      %s213 = sphi 0, %s212
      %s229 = sphi 0, %s213
    $region4: #{tpu_custom_call.1} parent=1 // loop_header_branch
      %30 = sbr.rel (%p28) target = $region8
    $region5: #{tpu_custom_call.1} parent=1 // loop_body
      %s32 = ssub.s32 %s27, 1
      %s33 = ssub.s32 %s27, 2
      %s34 = sadd.s32 %s27, 1
      %s35 = ssub.s32 %s27, %s34
      %p36 = scmp.eq.s32.totalorder %s35, 0
      %s38 = sadd.s32 %s37, 1
      %s39 = scalar_select %p36, %s37, %s38
      %p42 = pneg %p36
      %p43 = scmp.eq.s32.totalorder %s27, 3
      %p44 = por %p42, %p43
      %p45 = scmp.ne.s32.totalorder %s37, %s40
      %p46 = scmp.eq.s32.totalorder %s27, 0
      %p47 = por %p45, %p46
      %p48 = scmp.ne.s32.totalorder %s37, %s40
      %p49 = scmp.eq.s32.totalorder %s32, 3
      %p50 = por %p48, %p49
      %p51 = scmp.ne.s32.totalorder %s40, %s41
      %p52 = scmp.eq.s32.totalorder %s32, 0
      %p53 = por %p51, %p52
      %p54 = scmp.ne.s32.totalorder %s40, %s41
      %p55 = scmp.eq.s32.totalorder %s33, 3
      %p56 = por %p54, %p55
      %p58 = scmp.ne.s32.totalorder %s41, %s57
      %p59 = scmp.eq.s32.totalorder %s33, 0
      %p60 = por %p58, %p59
      %s61 = ssub.s32 %s27, %s34
      %p62 = scmp.eq.s32.totalorder %s61, 0
      %s64 = sadd.s32 %s63, 1
      %s65 = scalar_select %p62, %s63, %s64
      %p68 = pneg %p62
      %p69 = scmp.eq.s32.totalorder %s27, 3
      %p70 = por %p68, %p69
      %p71 = scmp.ne.s32.totalorder %s63, %s66
      %p72 = scmp.eq.s32.totalorder %s27, 0
      %p73 = por %p71, %p72
      %p74 = scmp.ne.s32.totalorder %s63, %s66
      %p75 = scmp.eq.s32.totalorder %s32, 3
      %p76 = por %p74, %p75
      %p77 = scmp.ne.s32.totalorder %s66, %s67
      %p78 = scmp.eq.s32.totalorder %s32, 0
      %p79 = por %p77, %p78
      %p80 = scmp.ne.s32.totalorder %s66, %s67
      %p81 = scmp.eq.s32.totalorder %s33, 3
      %p82 = por %p80, %p81
      %p84 = scmp.ne.s32.totalorder %s67, %s83
      %p85 = scmp.eq.s32.totalorder %s33, 0
      %p86 = por %p84, %p85
      %s87 = ssub.s32 %s27, %s34
      %p88 = scmp.eq.s32.totalorder %s87, 0
      %s90 = sadd.s32 %s89, 1
      %s91 = scalar_select %p88, %s89, %s90
      %p94 = pneg %p88
      %p95 = scmp.eq.s32.totalorder %s27, 3
      %p96 = por %p94, %p95
      %p97 = scmp.ne.s32.totalorder %s89, %s92
      %p98 = scmp.eq.s32.totalorder %s27, 0
      %p99 = por %p97, %p98
      %p100 = scmp.ne.s32.totalorder %s89, %s92
      %p101 = scmp.eq.s32.totalorder %s32, 3
      %p102 = por %p100, %p101
      %p103 = scmp.ne.s32.totalorder %s92, %s93
      %p104 = scmp.eq.s32.totalorder %s32, 0
      %p105 = por %p103, %p104
      %p106 = scmp.ne.s32.totalorder %s92, %s93
      %p107 = scmp.eq.s32.totalorder %s33, 3
      %p108 = por %p106, %p107
      %p110 = scmp.ne.s32.totalorder %s93, %s109
      %p111 = scmp.eq.s32.totalorder %s33, 0
      %p112 = por %p110, %p111
      %s114 = sadd.s32 %s113, 1
      %p117 = scmp.eq.s32.totalorder %s27, 3
      %p118 = scmp.ne.s32.totalorder %s113, %s115
      %p119 = scmp.eq.s32.totalorder %s27, 0
      %p120 = por %p118, %p119
      %p121 = scmp.ne.s32.totalorder %s113, %s115
      %p122 = scmp.eq.s32.totalorder %s32, 3
      %p123 = por %p121, %p122
      %p124 = scmp.ne.s32.totalorder %s115, %s116
      %p125 = scmp.eq.s32.totalorder %s32, 0
      %p126 = por %p124, %p125
      %p127 = scmp.ne.s32.totalorder %s115, %s116
      %p128 = scmp.eq.s32.totalorder %s33, 3
      %p129 = por %p127, %p128
      %p131 = scmp.ne.s32.totalorder %s116, %s130
      %p132 = scmp.eq.s32.totalorder %s33, 0
      %p133 = por %p131, %p132
      %s135 = sadd.s32 %s134, 1
      %p138 = scmp.eq.s32.totalorder %s27, 3
      %p139 = scmp.ne.s32.totalorder %s134, %s136
      %p140 = scmp.eq.s32.totalorder %s27, 0
      %p141 = por %p139, %p140
      %p142 = scmp.ne.s32.totalorder %s134, %s136
      %p143 = scmp.eq.s32.totalorder %s32, 3
      %p144 = por %p142, %p143
      %p145 = scmp.ne.s32.totalorder %s136, %s137
      %p146 = scmp.eq.s32.totalorder %s32, 0
      %p147 = por %p145, %p146
      %p148 = scmp.ne.s32.totalorder %s136, %s137
      %p149 = scmp.eq.s32.totalorder %s33, 3
      %p150 = por %p148, %p149
      %p152 = scmp.ne.s32.totalorder %s137, %s151
      %p153 = scmp.eq.s32.totalorder %s33, 0
      %p154 = por %p152, %p153
      %s155 = ssub.s32 %s27, %s34
      %p156 = scmp.eq.s32.totalorder %s155, 0
      %s158 = sadd.s32 %s157, 1
      %s159 = scalar_select %p156, %s157, %s158
      %p162 = pneg %p156
      %p163 = scmp.eq.s32.totalorder %s27, 3
      %p164 = por %p162, %p163
      %p165 = scmp.ne.s32.totalorder %s157, %s160
      %p166 = scmp.eq.s32.totalorder %s27, 0
      %p167 = por %p165, %p166
      %p168 = scmp.ne.s32.totalorder %s157, %s160
      %p169 = scmp.eq.s32.totalorder %s32, 3
      %p170 = por %p168, %p169
      %p171 = scmp.ne.s32.totalorder %s160, %s161
      %p172 = scmp.eq.s32.totalorder %s32, 0
      %p173 = por %p171, %p172
      %p174 = scmp.ne.s32.totalorder %s160, %s161
      %p175 = scmp.eq.s32.totalorder %s33, 3
      %p176 = por %p174, %p175
      %p178 = scmp.ne.s32.totalorder %s161, %s177
      %p179 = scmp.eq.s32.totalorder %s33, 0
      %p180 = por %p178, %p179
      %s181 = ssub.s32 %s27, %s34
      %p182 = scmp.eq.s32.totalorder %s181, 0
      %s184 = sadd.s32 %s183, 1
      %s185 = scalar_select %p182, %s183, %s184
      %p188 = pneg %p182
      %p189 = scmp.eq.s32.totalorder %s27, 3
      %p190 = por %p188, %p189
      %p191 = scmp.ne.s32.totalorder %s183, %s186
      %p192 = scmp.eq.s32.totalorder %s27, 0
      %p193 = por %p191, %p192
      %p194 = scmp.ne.s32.totalorder %s183, %s186
      %p195 = scmp.eq.s32.totalorder %s32, 3
      %p196 = por %p194, %p195
      %p197 = scmp.ne.s32.totalorder %s186, %s187
      %p198 = scmp.eq.s32.totalorder %s32, 0
      %p199 = por %p197, %p198
      %p200 = scmp.ne.s32.totalorder %s186, %s187
      %p201 = scmp.eq.s32.totalorder %s33, 3
      %p202 = por %p200, %p201
      %p204 = scmp.ne.s32.totalorder %s187, %s203
      %p205 = scmp.eq.s32.totalorder %s33, 0
      %p206 = por %p204, %p205
      %s207 = ssub.s32 %s27, %s34
      %p208 = scmp.eq.s32.totalorder %s207, 0
      %s210 = sadd.s32 %s209, 1
      %s211 = scalar_select %p208, %s209, %s210
      %p214 = pneg %p208
      %p215 = scmp.eq.s32.totalorder %s27, 3
      %p216 = por %p214, %p215
      %p217 = scmp.ne.s32.totalorder %s209, %s212
      %p218 = scmp.eq.s32.totalorder %s27, 0
      %p219 = por %p217, %p218
      %p220 = scmp.ne.s32.totalorder %s209, %s212
      %p221 = scmp.eq.s32.totalorder %s32, 3
      %p222 = por %p220, %p221
      %p223 = scmp.ne.s32.totalorder %s212, %s213
      %p224 = scmp.eq.s32.totalorder %s32, 0
      %p225 = por %p223, %p224
      %p226 = scmp.ne.s32.totalorder %s212, %s213
      %p227 = scmp.eq.s32.totalorder %s33, 3
      %p228 = por %p226, %p227
      %p230 = scmp.ne.s32.totalorder %s213, %s229
      %p231 = scmp.eq.s32.totalorder %s33, 0
      %p232 = por %p230, %p231
      %p233 = scmp.le.s32.totalorder 1, %s27
      %p234 = scmp.lt.s32.totalorder %s27, 5
      %p235 = pnand %p233, %p234
      %p236 = pneg %p235
      // Predicated region
      $region9: #{tpu_custom_call.1} parent=5 // pred_check
        _
      $region10: #{tpu_custom_call.1} parent=5 // pred_check_branch
        %238 = sbr.rel (%p235) target = $region12
      $region11: #{tpu_custom_call.1} parent=5 // pred_region
        %s239 = ssub.s32 %s27, 1
        // Predicated region
        $region13: #{tpu_custom_call.1} parent=11 // pred_check
          %p240 = pneg %p126
        $region14: #{tpu_custom_call.1} parent=11 // pred_check_branch
          %242 = sbr.rel (%p240) target = $region16
        $region15: #{tpu_custom_call.1} parent=11 // pred_region
          %244 = vsyncadd [#allocation9], 0
          %s245 = sshll.u32 %s3, 4
          %s246 = int_to_ptr.hbm [resolvable:$true] %s245
          %s247 = sshll.u32 [#allocation8], 4
          %s248 = int_to_ptr.vmem [resolvable:$true] %s247
          %253 = dma.hbm_to_vmem [thread:$0]  %s246, 1024, %s248, [#allocation9], 64, 64, 4
        $region16: #{tpu_custom_call.1} parent=11 // pred_fallthru
          _
        // Predicated region
        $region17: #{tpu_custom_call.1} parent=11 // pred_check
          %p254 = pneg %p147
        $region18: #{tpu_custom_call.1} parent=11 // pred_check_branch
          %256 = sbr.rel (%p254) target = $region20
        $region19: #{tpu_custom_call.1} parent=11 // pred_region
          _
        $region20: #{tpu_custom_call.1} parent=11 // pred_fallthru
          _
      $region12: #{tpu_custom_call.1} parent=5 // pred_fallthru
        _
      %p257 = scmp.lt.s32.totalorder %s27, 4
      // Predicated region
      $region21: #{tpu_custom_call.1} parent=5 // pred_check
        %p258 = pneg %p257
      $region22: #{tpu_custom_call.1} parent=5 // pred_check_branch
        %260 = sbr.rel (%p258) target = $region24
      $region23: #{tpu_custom_call.1} parent=5 // pred_region
        // Predicated region
        $region25: #{tpu_custom_call.1} parent=23 // pred_check
          %p261 = pneg %p47
        $region26: #{tpu_custom_call.1} parent=23 // pred_check_branch
          %263 = sbr.rel (%p261) target = $region28
        $region27: #{tpu_custom_call.1} parent=23 // pred_region
          %s264 = sand.u32 %s37, 1
          %s265 = scalar_lea.sflag [#allocation3], %s264
          %s266 = sand.u32 %s37, 1
          %s267 = smul.addr %s266, 4
          %s268 = scalar_lea.vmem [#allocation2], %s267
          %270 = vsyncadd %s265, 0
          %s271 = smul.addr %s27, 4
          %s272 = scalar_lea.hbm %s0, %s271
          %s274 = sshll.u32 %s272, 4
          %s275 = int_to_ptr.hbm [resolvable:$true] %s274
          %s276 = sshll.u32 %s268, 4
          %s277 = int_to_ptr.vmem [resolvable:$true] %s276
          %279 = dma.hbm_to_vmem [thread:$0]  %s275, 64, %s277, %s265
        $region28: #{tpu_custom_call.1} parent=23 // pred_fallthru
          _
        // Predicated region
        $region29: #{tpu_custom_call.1} parent=23 // pred_check
          %p280 = pneg %p73
        $region30: #{tpu_custom_call.1} parent=23 // pred_check_branch
          %282 = sbr.rel (%p280) target = $region32
        $region31: #{tpu_custom_call.1} parent=23 // pred_region
          %s283 = sand.u32 %s27, 1
          %s284 = scalar_lea.sflag [#allocation6], %s283
          %s285 = sand.u32 %s63, 1
          %s286 = smul.addr %s285, 4
          %s287 = scalar_lea.vmem [#allocation5], %s286
          %289 = vsyncadd %s284, 0
          %s290 = smul.addr %s27, 4
          %s291 = scalar_lea.hbm %s1, %s290
          %s293 = sshll.u32 %s291, 4
          %s294 = int_to_ptr.hbm [resolvable:$true] %s293
          %s295 = sshll.u32 %s287, 4
          %s296 = int_to_ptr.vmem [resolvable:$true] %s295
          %298 = dma.hbm_to_vmem [thread:$0]  %s294, 64, %s296, %s284
        $region32: #{tpu_custom_call.1} parent=23 // pred_fallthru
          _
        // Predicated region
        $region33: #{tpu_custom_call.1} parent=23 // pred_check
          %p299 = pneg %p99
        $region34: #{tpu_custom_call.1} parent=23 // pred_check_branch
          %301 = sbr.rel (%p299) target = $region36
        $region35: #{tpu_custom_call.1} parent=23 // pred_region
          %s302 = sand.u32 %s27, 1
          %s303 = scalar_lea.sflag [#allocation6], %s302
          %s304 = sand.u32 %s89, 1
          %s305 = smul.addr %s304, 4
          %s306 = scalar_lea.vmem [#allocation7], %s305
          %308 = vsyncadd %s303, 0
          %s309 = smul.addr %s27, 4
          %s310 = scalar_lea.hbm %s2, %s309
          %s312 = sshll.u32 %s310, 4
          %s313 = int_to_ptr.hbm [resolvable:$true] %s312
          %s314 = sshll.u32 %s306, 4
          %s315 = int_to_ptr.vmem [resolvable:$true] %s314
          %317 = dma.hbm_to_vmem [thread:$0]  %s313, 64, %s315, %s303
        $region36: #{tpu_custom_call.1} parent=23 // pred_fallthru
          _
      $region24: #{tpu_custom_call.1} parent=5 // pred_fallthru
        _
      %p318 = scmp.le.s32.totalorder 1, %s27
      %p319 = scmp.lt.s32.totalorder %s27, 5
      %p320 = pnand %p318, %p319
      %p321 = pneg %p320
      // Predicated region
      $region37: #{tpu_custom_call.1} parent=5 // pred_check
        _
      $region38: #{tpu_custom_call.1} parent=5 // pred_check_branch
        %323 = sbr.rel (%p320) target = $region40
      $region39: #{tpu_custom_call.1} parent=5 // pred_region
        %s324 = ssub.s32 %s27, 1
        %s325 = sand.u32 %s40, 1
        %s326 = scalar_lea.sflag [#allocation3], %s325
        %s327 = sand.u32 %s40, 1
        %s328 = smul.addr %s327, 4
        %s329 = scalar_lea.vmem [#allocation2], %s328
        // Predicated region
        $region41: #{tpu_custom_call.1} parent=39 // pred_check
          %p330 = pneg %p53
        $region42: #{tpu_custom_call.1} parent=39 // pred_check_branch
          %332 = sbr.rel (%p330) target = $region44
        $region43: #{tpu_custom_call.1} parent=39 // pred_region
          %334 = dma.done %s326, 64
        $region44: #{tpu_custom_call.1} parent=39 // pred_fallthru
          _
        %s335 = sand.u32 %s32, 1
        %s336 = scalar_lea.sflag [#allocation6], %s335
        %s337 = sand.u32 %s66, 1
        %s338 = smul.addr %s337, 4
        %s339 = scalar_lea.vmem [#allocation5], %s338
        // Predicated region
        $region45: #{tpu_custom_call.1} parent=39 // pred_check
          %p340 = pneg %p79
        $region46: #{tpu_custom_call.1} parent=39 // pred_check_branch
          %342 = sbr.rel (%p340) target = $region48
        $region47: #{tpu_custom_call.1} parent=39 // pred_region
          %344 = dma.done %s336, 64
        $region48: #{tpu_custom_call.1} parent=39 // pred_fallthru
          _
        %s345 = sand.u32 %s32, 1
        %s346 = scalar_lea.sflag [#allocation6], %s345
        %s347 = sand.u32 %s92, 1
        %s348 = smul.addr %s347, 4
        %s349 = scalar_lea.vmem [#allocation7], %s348
        // Predicated region
        $region49: #{tpu_custom_call.1} parent=39 // pred_check
          %p350 = pneg %p105
        $region50: #{tpu_custom_call.1} parent=39 // pred_check_branch
          %352 = sbr.rel (%p350) target = $region52
        $region51: #{tpu_custom_call.1} parent=39 // pred_region
          %354 = dma.done %s346, 64
        $region52: #{tpu_custom_call.1} parent=39 // pred_fallthru
          _
        // Predicated region
        $region53: #{tpu_custom_call.1} parent=39 // pred_check
          %p355 = pneg %p126
        $region54: #{tpu_custom_call.1} parent=39 // pred_check_branch
          %357 = sbr.rel (%p355) target = $region56
        $region55: #{tpu_custom_call.1} parent=39 // pred_region
          %359 = dma.done [#allocation9], 1024
        $region56: #{tpu_custom_call.1} parent=39 // pred_fallthru
          _
        %s360 = sand.u32 %s40, 1
        %s361 = scalar_lea.sflag [#allocation3], %s360
        %s362 = sand.u32 %s40, 1
        %s363 = smul.addr %s362, 4
        %s364 = scalar_lea.vmem [#allocation2], %s363
        %p365 = pneg %p53
        %p366 = pneg %p50
        %s367 = sand.u32 %s32, 1
        %s368 = scalar_lea.sflag [#allocation6], %s367
        %s369 = sand.u32 %s66, 1
        %s370 = smul.addr %s369, 4
        %s371 = scalar_lea.vmem [#allocation5], %s370
        %p372 = pneg %p79
        %p373 = pneg %p76
        %s374 = sand.u32 %s32, 1
        %s375 = scalar_lea.sflag [#allocation6], %s374
        %s376 = sand.u32 %s92, 1
        %s377 = smul.addr %s376, 4
        %s378 = scalar_lea.vmem [#allocation7], %s377
        %p379 = pneg %p105
        %p380 = pneg %p102
        %p381 = pneg %p126
        %p382 = pneg %p123
        %p383 = pneg %p147
        %p384 = pneg %p144
        %p385 = pneg %p173
        %p386 = pneg %p170
        %s387 = sand.u32 %s160, 1
        %s388 = scalar_lea.sflag [#allocation4], %s387
        %s389 = sand.u32 %s160, 1
        %s390 = smul.addr %s389, 8
        %s391 = scalar_lea.vmem [#allocation10], %s390
        %p392 = pneg %p199
        %p393 = pneg %p196
        %s394 = sand.u32 %s32, 1
        %s395 = scalar_lea.sflag [#allocation12], %s394
        %s396 = sand.u32 %s186, 1
        %s397 = smul.addr %s396, 8
        %s398 = scalar_lea.vmem [#allocation11], %s397
        %p399 = pneg %p225
        %p400 = pneg %p222
        %s401 = sand.u32 %s32, 1
        %s402 = scalar_lea.sflag [#allocation12], %s401
        %s403 = sand.u32 %s212, 1
        %s404 = smul.addr %s403, 8
        %s405 = scalar_lea.vmem [#allocation13], %s404
        %v406 = vld [vmem:[#allocation8] sm:$0xf]
        %v407 = vld [vmem:[#allocation8 + $0x4] sm:$0xf]
        %v408 = vld [vmem:[#allocation8 + $0x8] sm:$0xf]
        %v409 = vld [vmem:[#allocation8 + $0xc] sm:$0xf]
        %v410 = vld [vmem:[#allocation8 + $0x10] sm:$0xf]
        %v411 = vld [vmem:[#allocation8 + $0x14] sm:$0xf]
        %v412 = vld [vmem:[#allocation8 + $0x18] sm:$0xf]
        %v413 = vld [vmem:[#allocation8 + $0x1c] sm:$0xf]
        %v414 = vld [vmem:[#allocation8 + $0x20] sm:$0xf]
        %v415 = vld [vmem:[#allocation8 + $0x24] sm:$0xf]
        %v416 = vld [vmem:[#allocation8 + $0x28] sm:$0xf]
        %v417 = vld [vmem:[#allocation8 + $0x2c] sm:$0xf]
        %v418 = vld [vmem:[#allocation8 + $0x30] sm:$0xf]
        %v419 = vld [vmem:[#allocation8 + $0x34] sm:$0xf]
        %v420 = vld [vmem:[#allocation8 + $0x38] sm:$0xf]
        %v421 = vld [vmem:[#allocation8 + $0x3c] sm:$0xf]
        %v422 = vld [vmem:[%s4] sm:$0x1]
        %v423 = vld [vmem:[%s329] sm:$0xf]
        %v425 = vperm.slane %v422, 0
        %v443 = vunpack.c.l.b16 %v406
        %v444 = vunpack.c.l.b16 %v407
        %v445 = vunpack.c.l.b16 %v408
        %v446 = vunpack.c.l.b16 %v409
        %v447 = vunpack.c.l.b16 %v410
        %v448 = vunpack.c.l.b16 %v411
        %v449 = vunpack.c.l.b16 %v412
        %v450 = vunpack.c.l.b16 %v413
        %v451 = vunpack.c.l.b16 %v414
        %v452 = vunpack.c.l.b16 %v415
        %v453 = vunpack.c.l.b16 %v416
        %v454 = vunpack.c.l.b16 %v417
        %v455 = vunpack.c.l.b16 %v418
        %v456 = vunpack.c.l.b16 %v419
        %v457 = vunpack.c.l.b16 %v420
        %v458 = vunpack.c.l.b16 %v421
        %v459 = vpack.c.b16 %v444, %v443
        %v460 = vpack.c.b16 %v446, %v445
        %v461 = vpack.c.b16 %v448, %v447
        %v462 = vpack.c.b16 %v450, %v449
        %v463 = vpack.c.b16 %v452, %v451
        %v464 = vpack.c.b16 %v454, %v453
        %v465 = vpack.c.b16 %v456, %v455
        %v466 = vpack.c.b16 %v458, %v457
        %475 = vmatpush.bf16.msra.mxu0 %v466
        %476 = vmatpush.bf16.msra.mxu0 %v465
        %477 = vmatpush.bf16.msra.mxu0 %v464
        %478 = vmatpush.bf16.msra.mxu0 %v463
        %479 = vmatpush.bf16.msra.mxu0 %v462
        %480 = vmatpush.bf16.msra.mxu0 %v461
        %481 = vmatpush.bf16.msra.mxu0 %v460
        %482 = vmatpush.bf16.msra.mxu0 %v459
        %483 = vmatmul.bf16.gmra.mxu0 %v423
        %v484 = vpop.f32.mrf.mxu0
        %v485 = vadd.f32 %v425, %v484
        %v486 = vpop.f32.mrf.mxu0
        %487 = vdwg.mxu0
        %v488 = vmul.f32 %v485, %v485
        %489 = vadd.xlane.f32.xlu0 %v488
        %v490 = vpop.xlane.xlu0 %489
        %v491 = vrsqrt.pop %v490
        %v492 = vmul.f32 %v491, %v490
        %v493 = vmul.f32 %v492, %v491
        %v494 = vmul.f32 0.5, %v493
        %v495 = vsub.f32 1.5, %v494
        %v496 = vmul.f32 %v491, %v495
        %vm497 = vweird.f32 %v490
        %vm498 = vweird.f32 %v491
        %vm499 = vmor %vm497, %vm498
        %v500 = vsel %vm499, %v491, %v496
        %v501 = vmul.f32 %v485, %v500
        %502 = vst [vmem:[%s391] sm:$0xff] %v501
        %v503 = vld [vmem:[%s339] sm:$0xf]
        %504 = vmatpush.bf16.msra.mxu0 %v466
        %505 = vmatpush.bf16.msra.mxu0 %v465
        %506 = vmatpush.bf16.msra.mxu0 %v464
        %507 = vmatpush.bf16.msra.mxu0 %v463
        %508 = vmatpush.bf16.msra.mxu0 %v462
        %509 = vmatpush.bf16.msra.mxu0 %v461
        %510 = vmatpush.bf16.msra.mxu0 %v460
        %511 = vmatpush.bf16.msra.mxu0 %v459
        %512 = vmatmul.bf16.gmra.mxu0 %v503
        %v513 = vpop.f32.mrf.mxu0
        %v514 = vadd.f32 %v425, %v513
        %v515 = vpop.f32.mrf.mxu0
        %516 = vdwg.mxu0
        %v517 = vmul.f32 %v514, %v514
        %518 = vadd.xlane.f32.xlu0 %v517
        %v519 = vpop.xlane.xlu0 %518
        %v520 = vrsqrt.pop %v519
        %v521 = vmul.f32 %v520, %v519
        %v522 = vmul.f32 %v521, %v520
        %v523 = vmul.f32 0.5, %v522
        %v524 = vsub.f32 1.5, %v523
        %v525 = vmul.f32 %v520, %v524
        %vm526 = vweird.f32 %v519
        %vm527 = vweird.f32 %v520
        %vm528 = vmor %vm526, %vm527
        %v529 = vsel %vm528, %v520, %v525
        %v530 = vmul.f32 %v514, %v529
        %531 = vst [vmem:[%s398] sm:$0xff] %v530
        %v532 = vld [vmem:[%s349] sm:$0xf]
        %533 = vmatpush.bf16.msra.mxu0 %v466
        %534 = vmatpush.bf16.msra.mxu0 %v465
        %535 = vmatpush.bf16.msra.mxu0 %v464
        %536 = vmatpush.bf16.msra.mxu0 %v463
        %537 = vmatpush.bf16.msra.mxu0 %v462
        %538 = vmatpush.bf16.msra.mxu0 %v461
        %539 = vmatpush.bf16.msra.mxu0 %v460
        %540 = vmatpush.bf16.msra.mxu0 %v459
        %541 = vmatmul.bf16.gmra.mxu0 %v532
        %v542 = vpop.f32.mrf.mxu0
        %v543 = vadd.f32 %v425, %v542
        %v544 = vpop.f32.mrf.mxu0
        %545 = vdwg.mxu0
        %v546 = vmul.f32 %v543, %v543
        %547 = vadd.xlane.f32.xlu0 %v546
        %v548 = vpop.xlane.xlu0 %547
        %v549 = vrsqrt.pop %v548
        %v550 = vmul.f32 %v549, %v548
        %v551 = vmul.f32 %v550, %v549
        %v552 = vmul.f32 0.5, %v551
        %v553 = vsub.f32 1.5, %v552
        %v554 = vmul.f32 %v549, %v553
        %vm555 = vweird.f32 %v548
        %vm556 = vweird.f32 %v549
        %vm557 = vmor %vm555, %vm556
        %v558 = vsel %vm557, %v549, %v554
        %v559 = vmul.f32 %v543, %v558
        %560 = vst [vmem:[%s405] sm:$0xff] %v559
        %s561 = sand.u32 %s160, 1
        %s562 = scalar_lea.sflag [#allocation4], %s561
        %s563 = sand.u32 %s160, 1
        %s564 = smul.addr %s563, 8
        %s565 = scalar_lea.vmem [#allocation10], %s564
        %s566 = sand.u32 %s32, 1
        %s567 = scalar_lea.sflag [#allocation12], %s566
        %s568 = sand.u32 %s186, 1
        %s569 = smul.addr %s568, 8
        %s570 = scalar_lea.vmem [#allocation11], %s569
        %s571 = sand.u32 %s32, 1
        %s572 = scalar_lea.sflag [#allocation12], %s571
        %s573 = sand.u32 %s212, 1
        %s574 = smul.addr %s573, 8
        %s575 = scalar_lea.vmem [#allocation13], %s574
        // Predicated region
        $region57: #{tpu_custom_call.1} parent=39 // pred_check
          %p576 = pneg %p170
        $region58: #{tpu_custom_call.1} parent=39 // pred_check_branch
          %578 = sbr.rel (%p576) target = $region60
        $region59: #{tpu_custom_call.1} parent=39 // pred_region
          %580 = vsyncadd %s562, 0
          %s581 = smul.addr %s32, 8
          %s582 = scalar_lea.hbm %s5, %s581
          %s584 = sshll.u32 %s565, 4
          %s585 = int_to_ptr.vmem [resolvable:$true] %s584
          %s586 = sshll.u32 %s582, 4
          %s587 = int_to_ptr.hbm [resolvable:$true] %s586
          %589 = dma.vmem_to_hbm [thread:$0]  %s585, 128, %s587, %s562
        $region60: #{tpu_custom_call.1} parent=39 // pred_fallthru
          _
        // Predicated region
        $region61: #{tpu_custom_call.1} parent=39 // pred_check
          %p590 = pneg %p196
        $region62: #{tpu_custom_call.1} parent=39 // pred_check_branch
          %592 = sbr.rel (%p590) target = $region64
        $region63: #{tpu_custom_call.1} parent=39 // pred_region
          %594 = vsyncadd %s567, 0
          %s595 = smul.addr %s32, 8
          %s596 = scalar_lea.hbm %s6, %s595
          %s598 = sshll.u32 %s570, 4
          %s599 = int_to_ptr.vmem [resolvable:$true] %s598
          %s600 = sshll.u32 %s596, 4
          %s601 = int_to_ptr.hbm [resolvable:$true] %s600
          %603 = dma.vmem_to_hbm [thread:$0]  %s599, 128, %s601, %s567
        $region64: #{tpu_custom_call.1} parent=39 // pred_fallthru
          _
        // Predicated region
        $region65: #{tpu_custom_call.1} parent=39 // pred_check
          %p604 = pneg %p222
        $region66: #{tpu_custom_call.1} parent=39 // pred_check_branch
          %606 = sbr.rel (%p604) target = $region68
        $region67: #{tpu_custom_call.1} parent=39 // pred_region
          %608 = vsyncadd %s572, 0
          %s609 = smul.addr %s32, 8
          %s610 = scalar_lea.hbm %s7, %s609
          %s612 = sshll.u32 %s575, 4
          %s613 = int_to_ptr.vmem [resolvable:$true] %s612
          %s614 = sshll.u32 %s610, 4
          %s615 = int_to_ptr.hbm [resolvable:$true] %s614
          %617 = dma.vmem_to_hbm [thread:$0]  %s613, 128, %s615, %s572
        $region68: #{tpu_custom_call.1} parent=39 // pred_fallthru
          _
      $region40: #{tpu_custom_call.1} parent=5 // pred_fallthru
        _
      %p618 = scmp.le.s32.totalorder 2, %s27
      // Predicated region
      $region69: #{tpu_custom_call.1} parent=5 // pred_check
        %p619 = pneg %p618
      $region70: #{tpu_custom_call.1} parent=5 // pred_check_branch
        %621 = sbr.rel (%p619) target = $region72
      $region71: #{tpu_custom_call.1} parent=5 // pred_region
        %s622 = ssub.s32 %s27, 2
        // Predicated region
        $region73: #{tpu_custom_call.1} parent=71 // pred_check
          %p623 = pneg %p176
        $region74: #{tpu_custom_call.1} parent=71 // pred_check_branch
          %625 = sbr.rel (%p623) target = $region76
        $region75: #{tpu_custom_call.1} parent=71 // pred_region
          %s626 = sand.u32 %s161, 1
          %s627 = scalar_lea.sflag [#allocation4], %s626
          %s628 = sand.u32 %s161, 1
          %s629 = smul.addr %s628, 8
          %s630 = scalar_lea.vmem [#allocation10], %s629
          %632 = dma.done %s627, 128
        $region76: #{tpu_custom_call.1} parent=71 // pred_fallthru
          _
        // Predicated region
        $region77: #{tpu_custom_call.1} parent=71 // pred_check
          %p633 = pneg %p202
        $region78: #{tpu_custom_call.1} parent=71 // pred_check_branch
          %635 = sbr.rel (%p633) target = $region80
        $region79: #{tpu_custom_call.1} parent=71 // pred_region
          %s636 = sand.u32 %s33, 1
          %s637 = scalar_lea.sflag [#allocation12], %s636
          %s638 = sand.u32 %s187, 1
          %s639 = smul.addr %s638, 8
          %s640 = scalar_lea.vmem [#allocation11], %s639
          %642 = dma.done %s637, 128
        $region80: #{tpu_custom_call.1} parent=71 // pred_fallthru
          _
        // Predicated region
        $region81: #{tpu_custom_call.1} parent=71 // pred_check
          %p643 = pneg %p228
        $region82: #{tpu_custom_call.1} parent=71 // pred_check_branch
          %645 = sbr.rel (%p643) target = $region84
        $region83: #{tpu_custom_call.1} parent=71 // pred_region
          %s646 = sand.u32 %s33, 1
          %s647 = scalar_lea.sflag [#allocation12], %s646
          %s648 = sand.u32 %s213, 1
          %s649 = smul.addr %s648, 8
          %s650 = scalar_lea.vmem [#allocation13], %s649
          %652 = dma.done %s647, 128
        $region84: #{tpu_custom_call.1} parent=71 // pred_fallthru
          _
      $region72: #{tpu_custom_call.1} parent=5 // pred_fallthru
        _
    $region6: #{tpu_custom_call.1} parent=1 // loop_footer
      %s31 = sadd.s32 1, %s27
    $region7: #{tpu_custom_call.1} parent=1 // loop_footer_branch
      %26 = sbr.rel target = $region3
    $region8: #{tpu_custom_call.1} parent=1 // loop_exit
      _
    %653 = vsyncpa [#allocation3], 1
    %s654 = scalar_lea.sflag [#allocation3], 1
    %655 = vsyncpa %s654, 1
    %656 = vsyncpa [#allocation6], 1
    %s657 = scalar_lea.sflag [#allocation6], 1
    %658 = vsyncpa %s657, 1
    %659 = vsyncpa [#allocation9], 1
    %660 = vsyncpa [#allocation4], 1
    %s661 = scalar_lea.sflag [#allocation4], 1
    %662 = vsyncpa %s661, 1
    %663 = vsyncpa [#allocation12], 1
    %s664 = scalar_lea.sflag [#allocation12], 1
    %665 = vsyncpa %s664, 1

</llo_original>
